<compile_context>
chip_gen: v5e
topology: v5e:2x2
jax: 0.10.0
libtpu: 0.0.40
codegen_flags: <defaults>
</compile_context>

<pallas_src>
import functools

import jax
import jax.numpy as jnp
from jax.experimental import pallas as pl
from jax.experimental.pallas import tpu as pltpu


def _round_up(x, m):
    return ((x + m - 1) // m) * m


def _pick_tile(total, candidates):
    for c in candidates:
        if total % c == 0:
            return c
    return total


# ------------------------------ Pallas kernel ------------------------------ #
def wwm_kernel(
    xe_ref,      # (S, TB, Dp)  bf16  embedded input, time-major batch tile
    lens_ref,    # (TB, 1)      int32 valid lengths (padded rows -> 0)
    h0_ref,      # (TB, Hp)     f32   initial hidden (Wr[0] rows, zero-padded)
    wih_t_ref,   # (Dp, Hp)     bf16  W_ih^T, padded (pinned across grid)
    whh_t_ref,   # (Hp, Hp)     bf16  W_hh^T, padded (pinned)
    b_ref,       # (1, Hp)      f32   b_ih + b_hh, padded (pinned)
    wc_ref,      # (TB, Hp, Hp) bf16  Wc[argmax(Xc,1)], zero-padded
    wmy_t_ref,   # (Hp, TV)     bf16  [Wm^T | Wy^T | 0-pad] vocab tile
    wmy_b_ref,   # (1, TV)      f32   fused bias, vocab tile
    out_ref,     # (TB, TV)     f32   fused output tile
    xp_ref,      # scratch (S, TB, Hp) f32  hoisted input projection
    z_ref,       # scratch (TB, Hp)    bf16 hs + bc, carried across vocab tiles
    *,
    seq_len,
    bc_chunk,
):
    j = pl.program_id(1)  # vocab-tile axis (innermost, "arbitrary")

    # The recurrent state depends only on the batch tile; compute it once per
    # batch tile (at the first vocab tile) and stash it in VMEM scratch.
    @pl.when(j == 0)
    def _compute_state():
        TB, Hp = h0_ref.shape
        S = seq_len

        # Input projection hoisted out of the recurrence; staged through VMEM
        # scratch so only one (TB, Hp) slice is live per timestep.
        wih_t = wih_t_ref[...]
        bias = b_ref[...]
        for t in range(S):
            xp_ref[t] = (
                jnp.dot(xe_ref[t], wih_t, preferred_element_type=jnp.float32)
                + bias
            )

        # Hoisted loads / broadcast (JAX does not CSE broadcast_in_dim in loops).
        whh_t = whh_t_ref[...]
        lens_b = jnp.broadcast_to(lens_ref[...], (TB, Hp))

        # tanh RNN recurrence, statically unrolled; per-sequence length masking
        # reproduces pack_padded_sequence "hidden frozen at last valid step".
        # TODO(synk): h kept in f32 for fidelity to nn.RNN; a bf16-h variant
        # would drop one cast/step from the serial chain on v6e/v7x.
        h = h0_ref[...]
        for t in range(S):
            pre = (
                jnp.dot(h.astype(jnp.bfloat16), whh_t,
                        preferred_element_type=jnp.float32)
                + xp_ref[t]
            )
            h = jnp.where(t < lens_b, jnp.tanh(pre), h)

        # bc[b, k] = sum_h hs[b, h] * Wc_sel[b, h, k] — VPU broadcast-mul + XLU
        # reduce, chunked over the contraction (sublane) axis so the live
        # product stays within the vreg file (no VMEM spills).
        bc = jnp.zeros((TB, Hp), jnp.float32)
        for c in range(0, Hp, bc_chunk):
            wc_c = wc_ref[:, c:c + bc_chunk, :].astype(jnp.float32)  # (TB,C,Hp)
            h_c = h[:, c:c + bc_chunk]                               # (TB,C)
            bc = bc + jnp.sum(h_c[:, :, None] * wc_c, axis=1)

        # TODO(synk): dropout treated as identity (eval-mode / deterministic).
        z_ref[...] = (h + bc).astype(jnp.bfloat16)

    # Fused, lane-dense output head tile: one MXU matmul + unmasked dense store.
    out_ref[...] = (
        jnp.dot(z_ref[...], wmy_t_ref[...], preferred_element_type=jnp.float32)
        + wmy_b_ref[...]
    )


# --------------------- one-time parameter preparation ---------------------- #
def prepare_wwm_params(params, batch_size):
    """Pad / transpose / cast weights ONCE (hoisted out of the per-call path)."""
    D = params["embed"].shape[1]
    H = params["W_hh"].shape[0]
    V = params["Wm_w"].shape[0]
    B = batch_size
    if params["Wr"].shape[1] != B:
        raise ValueError(
            f"Wr was initialised for batch_size={params['Wr'].shape[1]} "
            f"but runtime batch is {B}")

    Bp = _round_up(max(B, 8), 8)
    if Bp > 128:
        Bp = _round_up(Bp, 128)
    Dp = _round_up(max(D, 128), 128)
    Hp = _round_up(max(H, 128), 128)
    Vp = _round_up(V + 1, 128)  # +1 lane holds the Wy column

    f32, bf16 = jnp.float32, jnp.bfloat16

    embed_p = (jnp.zeros((params["embed"].shape[0], Dp), f32)
               .at[:, :D].set(params["embed"]).astype(bf16))
    wih_t = jnp.zeros((Dp, Hp), f32).at[:D, :H].set(params["W_ih"].T).astype(bf16)
    whh_t = jnp.zeros((Hp, Hp), f32).at[:H, :H].set(params["W_hh"].T).astype(bf16)
    b = jnp.zeros((1, Hp), f32).at[0, :H].set(params["b_ih"] + params["b_hh"])
    h0 = jnp.zeros((Bp, Hp), f32).at[:B, :H].set(params["Wr"][0])
    wc_p = (jnp.zeros((params["Wc"].shape[0], Hp, Hp), f32)
            .at[:, :H, :H].set(params["Wc"]).astype(bf16))

    wmy_t = jnp.zeros((Hp, Vp), f32)
    wmy_t = wmy_t.at[:H, :V].set(params["Wm_w"].T)
    wmy_t = wmy_t.at[:H, V].set(params["Wy_w"][0])
    wmy_t = wmy_t.astype(bf16)
    wmy_b = (jnp.zeros((1, Vp), f32)
             .at[0, :V].set(params["Wm_b"]).at[0, V].set(params["Wy_b"][0]))

    return dict(embed_p=embed_p, wih_t=wih_t, whh_t=whh_t, b=b, h0=h0,
                wc_p=wc_p, wmy_t=wmy_t, wmy_b=wmy_b)


# ------------------------------ JAX wrapper -------------------------------- #
def wwm_forward(padded, X, X_lengths, Xc, *, n_vocab):
    """X: (B,S) int ids, X_lengths: (B,) lengths (desc-sorted), Xc: (B, n_factors)."""
    B, S = X.shape
    Bp, Hp = padded["h0"].shape
    Dp = padded["embed_p"].shape[1]
    Vp = padded["wmy_t"].shape[1]
    V = n_vocab

    TB = _pick_tile(Bp, (128, 64, 32, 16, 8))
    TV = _pick_tile(Vp, (512, 256, 128))
    NB, NV = Bp // TB, Vp // TV

    # Per-call glue: pad ids / lengths, bf16 embedding gather fused with the
    # time-major transpose, per-sample factor-matrix gather.
    Xpad = jnp.zeros((Bp, S), jnp.int32).at[:B].set(X.astype(jnp.int32))
    lens = jnp.zeros((Bp, 1), jnp.int32).at[:B, 0].set(X_lengths.astype(jnp.int32))
    Xe = padded["embed_p"][Xpad.T]                        # (S, Bp, Dp) bf16
    wc_sel = padded["wc_p"][jnp.argmax(Xc, axis=1)]       # (B, Hp, Hp) bf16
    wc = jnp.zeros((Bp, Hp, Hp), jnp.bfloat16).at[:B].set(wc_sel)

    operands = (Xe, lens, padded["h0"], padded["wih_t"], padded["whh_t"],
                padded["b"], wc, padded["wmy_t"], padded["wmy_b"])

    in_specs = [
        pl.BlockSpec((S, TB, Dp), lambda i, j: (0, i, 0)),   # Xe (batch tiled)
        pl.BlockSpec((TB, 1), lambda i, j: (i, 0)),          # lens
        pl.BlockSpec((TB, Hp), lambda i, j: (i, 0)),         # h0
        pl.BlockSpec((Dp, Hp), lambda i, j: (0, 0)),         # W_ih^T (pinned)
        pl.BlockSpec((Hp, Hp), lambda i, j: (0, 0)),         # W_hh^T (pinned)
        pl.BlockSpec((1, Hp), lambda i, j: (0, 0)),          # bias   (pinned)
        pl.BlockSpec((TB, Hp, Hp), lambda i, j: (i, 0, 0)),  # Wc_sel (batch tiled)
        pl.BlockSpec((Hp, TV), lambda i, j: (0, j)),         # fused head weights
        pl.BlockSpec((1, TV), lambda i, j: (0, j)),          # fused head bias
    ]
    out_specs = pl.BlockSpec((TB, TV), lambda i, j: (i, j))
    scratch_shapes = [
        pltpu.VMEM((S, TB, Hp), jnp.float32),   # staged input projection
        pltpu.VMEM((TB, Hp), jnp.bfloat16),     # hs + bc, reused across vocab tiles
    ]

    # VMEM budget: double-buffered per-tile working set + scratch + headroom,
    # capped at 3/4 of physical VMEM (v7x 64 MiB -> 48 MiB; v5e/v6e 128 -> 96 MiB).
    tile_bytes = (S * TB * Dp * 2 + TB * 4 + TB * Hp * 4 + Dp * Hp * 2
                  + Hp * Hp * 2 + Hp * 4 + TB * Hp * Hp * 2 + Hp * TV * 2
                  + TV * 4 + TB * TV * 4)
    scratch_bytes = S * TB * Hp * 4 + TB * Hp * 2
    want = 2 * tile_bytes + scratch_bytes + (4 << 20)
    try:
        phys = int(pltpu.get_tpu_info().vmem_capacity_bytes)
    except Exception:
        phys = 64 << 20
    vmem_limit = int(min(max(want, 32 << 20), (phys * 3) // 4))

    flops = 2 * (S * Bp * Dp * Hp + S * Bp * Hp * Hp + Bp * Hp * Hp
                 + Bp * Hp * Vp)
    bytes_accessed = (sum(x.size * x.dtype.itemsize for x in operands)
                      + Bp * Vp * 4)
    cost = pl.CostEstimate(flops=int(flops), transcendentals=int(S * Bp * Hp),
                           bytes_accessed=int(bytes_accessed))

    out = pl.pallas_call(
        functools.partial(wwm_kernel, seq_len=S, bc_chunk=16),
        grid=(NB, NV),
        in_specs=in_specs,
        out_specs=out_specs,
        out_shape=jax.ShapeDtypeStruct((Bp, Vp), jnp.float32),
        scratch_shapes=scratch_shapes,
        compiler_params=pltpu.CompilerParams(
            dimension_semantics=("parallel", "arbitrary"),
            vmem_limit_bytes=vmem_limit,
        ),
        cost_estimate=cost,
    )(*operands)

    # Strip padding; PyTorch: output_m squeezed to (B, V); output_y stays (1, B, 1).
    out_m = out[:B, :V]
    out_y = out[:B, V].reshape(1, B, 1)
    return out_m, out_y


# --------------------------- deterministic init ----------------------------- #
def init_params(key, vocab_size, embedding_dim, hidden, n_factors, batch_size):
    ks = jax.random.split(key, 10)

    def xavier(k, shape, fan_in, fan_out):
        std = (2.0 / (fan_in + fan_out)) ** 0.5
        return std * jax.random.normal(k, shape, dtype=jnp.float32)

    embed = 0.1 * jax.random.normal(ks[0], (vocab_size, embedding_dim), jnp.float32)
    embed = embed.at[0].set(0.0)  # padding_idx = vocab['<PAD>'] = 0

    return {
        "embed": embed,
        "W_ih": xavier(ks[1], (hidden, embedding_dim), embedding_dim, hidden),
        "W_hh": xavier(ks[2], (hidden, hidden), hidden, hidden),
        "b_ih": jnp.zeros((hidden,), jnp.float32),
        "b_hh": jnp.zeros((hidden,), jnp.float32),
        "Wr": xavier(ks[3], (1, batch_size, hidden), batch_size, hidden),
        "Wc": xavier(ks[4], (n_factors, hidden, hidden), hidden, hidden),
        "Wm_w": xavier(ks[5], (vocab_size, hidden), hidden, vocab_size),
        "Wm_b": jnp.zeros((vocab_size,), jnp.float32),
        "Wy_w": xavier(ks[6], (1, hidden), hidden, 1),
        "Wy_b": jnp.zeros((1,), jnp.float32),
    }


# ---------------------------------- main ------------------------------------ #
if __name__ == "__main__":
    # Small shapes consistent with the module defaults.
    B = 3            # batch_size default
    S = 8            # seq_len
    D = 3            # embedding_dim default
    H = 32           # nb_lstm_units (shrunk from 100)
    V = 12           # vocab size (incl. '<PAD>' at index 0)
    NF = 3           # n_factors default

    key = jax.random.PRNGKey(0)
    kp, kx, kc = jax.random.split(key, 3)

    params = init_params(kp, V, D, H, NF, B)

    X = jax.random.randint(kx, (B, S), 1, V, dtype=jnp.int32)      # word ids
    X_lengths = jnp.array([8, 6, 4], dtype=jnp.int32)               # sorted desc
    pos = jnp.arange(S)[None, :]
    X = jnp.where(pos < X_lengths[:, None], X, 0)                   # zero the padding
    Xc = jax.random.normal(kc, (B, NF), dtype=jnp.float32)          # factor logits

    padded = prepare_wwm_params(params, B)   # one-time, outside the per-call path
    fwd = jax.jit(functools.partial(wwm_forward, n_vocab=V))
    out_m, out_y = fwd(padded, X, X_lengths, Xc)
    jax.block_until_ready((out_m, out_y))

    assert out_m.shape == (B, V), out_m.shape
    assert out_y.shape == (1, B, 1), out_y.shape
    assert jnp.all(jnp.isfinite(out_m)) and jnp.all(jnp.isfinite(out_y))
    print("KERNEL_OK")
</pallas_src>

<mosaic_0001>
module attributes {stable_mosaic.version = 11 : i64} {
  func.func @wwm_kernel(%arg0: i32, %arg1: i32, %arg2: memref<8x8x128xbf16, #tpu.memory_space<vmem>>, %arg3: memref<8x1xi32, #tpu.memory_space<vmem>>, %arg4: memref<8x128xf32, #tpu.memory_space<vmem>>, %arg5: memref<128x128xbf16, #tpu.memory_space<vmem>>, %arg6: memref<128x128xbf16, #tpu.memory_space<vmem>>, %arg7: memref<1x128xf32, #tpu.memory_space<vmem>>, %arg8: memref<8x128x128xbf16, #tpu.memory_space<vmem>>, %arg9: memref<128x128xbf16, #tpu.memory_space<vmem>>, %arg10: memref<1x128xf32, #tpu.memory_space<vmem>>, %arg11: memref<8x128xf32, #tpu.memory_space<vmem>>, %arg12: memref<8x8x128xf32, #tpu.memory_space<vmem>>, %arg13: memref<8x128xbf16, #tpu.memory_space<vmem>>) attributes {dimension_semantics = [#tpu.dimension_semantics<parallel>, #tpu.dimension_semantics<arbitrary>], iteration_bounds = array<i64: 1, 1>, scalar_prefetch = 0 : i64, scratch_operands = 2 : i64, tpu.core_type = #tpu.core_type<tc>, window_params = [{transform_indices = @transform_0, window_bounds = array<i64: 8, 8, 128>}, {transform_indices = @transform_1, window_bounds = array<i64: 8, 1>}, {transform_indices = @transform_2, window_bounds = array<i64: 8, 128>}, {pipeline_mode = #tpu.pipeline_mode<synchronous>, transform_indices = @transform_3, window_bounds = array<i64: 128, 128>}, {pipeline_mode = #tpu.pipeline_mode<synchronous>, transform_indices = @transform_4, window_bounds = array<i64: 128, 128>}, {pipeline_mode = #tpu.pipeline_mode<synchronous>, transform_indices = @transform_5, window_bounds = array<i64: 1, 128>}, {transform_indices = @transform_6, window_bounds = array<i64: 8, 128, 128>}, {transform_indices = @transform_7, window_bounds = array<i64: 128, 128>}, {transform_indices = @transform_8, window_bounds = array<i64: 1, 128>}, {transform_indices = @transform_9, window_bounds = array<i64: 8, 128>}]} {
    %c0_i32 = arith.constant 0 : i32
    %0 = arith.cmpi eq, %arg1, %c0_i32 : i32
    %1 = arith.extui %0 : i1 to i32
    %c0_i32_0 = arith.constant 0 : i32
    %2 = arith.cmpi ne, %1, %c0_i32_0 : i32
    scf.if %2 {
      %c0_8 = arith.constant 0 : index
      %c0_9 = arith.constant 0 : index
      %10 = vector.load %arg5[%c0_8, %c0_9] : memref<128x128xbf16, #tpu.memory_space<vmem>>, vector<128x128xbf16>
      %c0_10 = arith.constant 0 : index
      %c0_11 = arith.constant 0 : index
      %11 = vector.load %arg7[%c0_10, %c0_11] : memref<1x128xf32, #tpu.memory_space<vmem>>, vector<1x128xf32>
      %c0_12 = arith.constant 0 : index
      %c0_13 = arith.constant 0 : index
      %c0_14 = arith.constant 0 : index
      %12 = vector.load %arg2[%c0_12, %c0_13, %c0_14] : memref<8x8x128xbf16, #tpu.memory_space<vmem>>, vector<1x8x128xbf16>
      %13 = vector.shape_cast %12 : vector<1x8x128xbf16> to vector<8x128xbf16>
      %cst_15 = arith.constant dense<0.000000e+00> : vector<8x128xf32>
      %14 = tpu.matmul %13, %10, %cst_15 {dimension_numbers = #tpu.dot_dimension_numbers<[1], [0], [0], [1], [0, 0, 1, 1], [], []>} : vector<8x128xbf16>, vector<128x128xbf16>, vector<8x128xf32> -> vector<8x128xf32>
      %15 = vector.broadcast %11 : vector<1x128xf32> to vector<8x128xf32>
      %16 = arith.addf %14, %15 : vector<8x128xf32>
      %c0_16 = arith.constant 0 : index
      %c0_17 = arith.constant 0 : index
      %c0_18 = arith.constant 0 : index
      %17 = vector.load %arg12[%c0_16, %c0_17, %c0_18] : memref<8x8x128xf32, #tpu.memory_space<vmem>>, vector<1x8x128xf32>
      %18 = vector.shape_cast %17 : vector<1x8x128xf32> to vector<8x128xf32>
      %19 = vector.shape_cast %16 : vector<8x128xf32> to vector<1x8x128xf32>
      tpu.vector_store %arg12[%c0_16, %c0_17, %c0_18], %19 {strides = array<i32>} : memref<8x8x128xf32, #tpu.memory_space<vmem>>, vector<1x8x128xf32>,
      %c1 = arith.constant 1 : index
      %c0_19 = arith.constant 0 : index
      %c0_20 = arith.constant 0 : index
      %20 = vector.load %arg2[%c1, %c0_19, %c0_20] : memref<8x8x128xbf16, #tpu.memory_space<vmem>>, vector<1x8x128xbf16>
      %21 = vector.shape_cast %20 : vector<1x8x128xbf16> to vector<8x128xbf16>
      %cst_21 = arith.constant dense<0.000000e+00> : vector<8x128xf32>
      %22 = tpu.matmul %21, %10, %cst_21 {dimension_numbers = #tpu.dot_dimension_numbers<[1], [0], [0], [1], [0, 0, 1, 1], [], []>} : vector<8x128xbf16>, vector<128x128xbf16>, vector<8x128xf32> -> vector<8x128xf32>
      %23 = vector.broadcast %11 : vector<1x128xf32> to vector<8x128xf32>
      %24 = arith.addf %22, %23 : vector<8x128xf32>
      %c1_22 = arith.constant 1 : index
      %c0_23 = arith.constant 0 : index
      %c0_24 = arith.constant 0 : index
      %25 = vector.load %arg12[%c1_22, %c0_23, %c0_24] : memref<8x8x128xf32, #tpu.memory_space<vmem>>, vector<1x8x128xf32>
      %26 = vector.shape_cast %25 : vector<1x8x128xf32> to vector<8x128xf32>
      %27 = vector.shape_cast %24 : vector<8x128xf32> to vector<1x8x128xf32>
      tpu.vector_store %arg12[%c1_22, %c0_23, %c0_24], %27 {strides = array<i32>} : memref<8x8x128xf32, #tpu.memory_space<vmem>>, vector<1x8x128xf32>,
      %c2 = arith.constant 2 : index
      %c0_25 = arith.constant 0 : index
      %c0_26 = arith.constant 0 : index
      %28 = vector.load %arg2[%c2, %c0_25, %c0_26] : memref<8x8x128xbf16, #tpu.memory_space<vmem>>, vector<1x8x128xbf16>
      %29 = vector.shape_cast %28 : vector<1x8x128xbf16> to vector<8x128xbf16>
      %cst_27 = arith.constant dense<0.000000e+00> : vector<8x128xf32>
      %30 = tpu.matmul %29, %10, %cst_27 {dimension_numbers = #tpu.dot_dimension_numbers<[1], [0], [0], [1], [0, 0, 1, 1], [], []>} : vector<8x128xbf16>, vector<128x128xbf16>, vector<8x128xf32> -> vector<8x128xf32>
      %31 = vector.broadcast %11 : vector<1x128xf32> to vector<8x128xf32>
      %32 = arith.addf %30, %31 : vector<8x128xf32>
      %c2_28 = arith.constant 2 : index
      %c0_29 = arith.constant 0 : index
      %c0_30 = arith.constant 0 : index
      %33 = vector.load %arg12[%c2_28, %c0_29, %c0_30] : memref<8x8x128xf32, #tpu.memory_space<vmem>>, vector<1x8x128xf32>
      %34 = vector.shape_cast %33 : vector<1x8x128xf32> to vector<8x128xf32>
      %35 = vector.shape_cast %32 : vector<8x128xf32> to vector<1x8x128xf32>
      tpu.vector_store %arg12[%c2_28, %c0_29, %c0_30], %35 {strides = array<i32>} : memref<8x8x128xf32, #tpu.memory_space<vmem>>, vector<1x8x128xf32>,
      %c3 = arith.constant 3 : index
      %c0_31 = arith.constant 0 : index
      %c0_32 = arith.constant 0 : index
      %36 = vector.load %arg2[%c3, %c0_31, %c0_32] : memref<8x8x128xbf16, #tpu.memory_space<vmem>>, vector<1x8x128xbf16>
      %37 = vector.shape_cast %36 : vector<1x8x128xbf16> to vector<8x128xbf16>
      %cst_33 = arith.constant dense<0.000000e+00> : vector<8x128xf32>
      %38 = tpu.matmul %37, %10, %cst_33 {dimension_numbers = #tpu.dot_dimension_numbers<[1], [0], [0], [1], [0, 0, 1, 1], [], []>} : vector<8x128xbf16>, vector<128x128xbf16>, vector<8x128xf32> -> vector<8x128xf32>
      %39 = vector.broadcast %11 : vector<1x128xf32> to vector<8x128xf32>
      %40 = arith.addf %38, %39 : vector<8x128xf32>
      %c3_34 = arith.constant 3 : index
      %c0_35 = arith.constant 0 : index
      %c0_36 = arith.constant 0 : index
      %41 = vector.load %arg12[%c3_34, %c0_35, %c0_36] : memref<8x8x128xf32, #tpu.memory_space<vmem>>, vector<1x8x128xf32>
      %42 = vector.shape_cast %41 : vector<1x8x128xf32> to vector<8x128xf32>
      %43 = vector.shape_cast %40 : vector<8x128xf32> to vector<1x8x128xf32>
      tpu.vector_store %arg12[%c3_34, %c0_35, %c0_36], %43 {strides = array<i32>} : memref<8x8x128xf32, #tpu.memory_space<vmem>>, vector<1x8x128xf32>,
      %c4 = arith.constant 4 : index
      %c0_37 = arith.constant 0 : index
      %c0_38 = arith.constant 0 : index
      %44 = vector.load %arg2[%c4, %c0_37, %c0_38] : memref<8x8x128xbf16, #tpu.memory_space<vmem>>, vector<1x8x128xbf16>
      %45 = vector.shape_cast %44 : vector<1x8x128xbf16> to vector<8x128xbf16>
      %cst_39 = arith.constant dense<0.000000e+00> : vector<8x128xf32>
      %46 = tpu.matmul %45, %10, %cst_39 {dimension_numbers = #tpu.dot_dimension_numbers<[1], [0], [0], [1], [0, 0, 1, 1], [], []>} : vector<8x128xbf16>, vector<128x128xbf16>, vector<8x128xf32> -> vector<8x128xf32>
      %47 = vector.broadcast %11 : vector<1x128xf32> to vector<8x128xf32>
      %48 = arith.addf %46, %47 : vector<8x128xf32>
      %c4_40 = arith.constant 4 : index
      %c0_41 = arith.constant 0 : index
      %c0_42 = arith.constant 0 : index
      %49 = vector.load %arg12[%c4_40, %c0_41, %c0_42] : memref<8x8x128xf32, #tpu.memory_space<vmem>>, vector<1x8x128xf32>
      %50 = vector.shape_cast %49 : vector<1x8x128xf32> to vector<8x128xf32>
      %51 = vector.shape_cast %48 : vector<8x128xf32> to vector<1x8x128xf32>
      tpu.vector_store %arg12[%c4_40, %c0_41, %c0_42], %51 {strides = array<i32>} : memref<8x8x128xf32, #tpu.memory_space<vmem>>, vector<1x8x128xf32>,
      %c5 = arith.constant 5 : index
      %c0_43 = arith.constant 0 : index
      %c0_44 = arith.constant 0 : index
      %52 = vector.load %arg2[%c5, %c0_43, %c0_44] : memref<8x8x128xbf16, #tpu.memory_space<vmem>>, vector<1x8x128xbf16>
      %53 = vector.shape_cast %52 : vector<1x8x128xbf16> to vector<8x128xbf16>
      %cst_45 = arith.constant dense<0.000000e+00> : vector<8x128xf32>
      %54 = tpu.matmul %53, %10, %cst_45 {dimension_numbers = #tpu.dot_dimension_numbers<[1], [0], [0], [1], [0, 0, 1, 1], [], []>} : vector<8x128xbf16>, vector<128x128xbf16>, vector<8x128xf32> -> vector<8x128xf32>
      %55 = vector.broadcast %11 : vector<1x128xf32> to vector<8x128xf32>
      %56 = arith.addf %54, %55 : vector<8x128xf32>
      %c5_46 = arith.constant 5 : index
      %c0_47 = arith.constant 0 : index
      %c0_48 = arith.constant 0 : index
      %57 = vector.load %arg12[%c5_46, %c0_47, %c0_48] : memref<8x8x128xf32, #tpu.memory_space<vmem>>, vector<1x8x128xf32>
      %58 = vector.shape_cast %57 : vector<1x8x128xf32> to vector<8x128xf32>
      %59 = vector.shape_cast %56 : vector<8x128xf32> to vector<1x8x128xf32>
      tpu.vector_store %arg12[%c5_46, %c0_47, %c0_48], %59 {strides = array<i32>} : memref<8x8x128xf32, #tpu.memory_space<vmem>>, vector<1x8x128xf32>,
      %c6 = arith.constant 6 : index
      %c0_49 = arith.constant 0 : index
      %c0_50 = arith.constant 0 : index
      %60 = vector.load %arg2[%c6, %c0_49, %c0_50] : memref<8x8x128xbf16, #tpu.memory_space<vmem>>, vector<1x8x128xbf16>
      %61 = vector.shape_cast %60 : vector<1x8x128xbf16> to vector<8x128xbf16>
      %cst_51 = arith.constant dense<0.000000e+00> : vector<8x128xf32>
      %62 = tpu.matmul %61, %10, %cst_51 {dimension_numbers = #tpu.dot_dimension_numbers<[1], [0], [0], [1], [0, 0, 1, 1], [], []>} : vector<8x128xbf16>, vector<128x128xbf16>, vector<8x128xf32> -> vector<8x128xf32>
      %63 = vector.broadcast %11 : vector<1x128xf32> to vector<8x128xf32>
      %64 = arith.addf %62, %63 : vector<8x128xf32>
      %c6_52 = arith.constant 6 : index
      %c0_53 = arith.constant 0 : index
      %c0_54 = arith.constant 0 : index
      %65 = vector.load %arg12[%c6_52, %c0_53, %c0_54] : memref<8x8x128xf32, #tpu.memory_space<vmem>>, vector<1x8x128xf32>
      %66 = vector.shape_cast %65 : vector<1x8x128xf32> to vector<8x128xf32>
      %67 = vector.shape_cast %64 : vector<8x128xf32> to vector<1x8x128xf32>
      tpu.vector_store %arg12[%c6_52, %c0_53, %c0_54], %67 {strides = array<i32>} : memref<8x8x128xf32, #tpu.memory_space<vmem>>, vector<1x8x128xf32>,
      %c7 = arith.constant 7 : index
      %c0_55 = arith.constant 0 : index
      %c0_56 = arith.constant 0 : index
      %68 = vector.load %arg2[%c7, %c0_55, %c0_56] : memref<8x8x128xbf16, #tpu.memory_space<vmem>>, vector<1x8x128xbf16>
      %69 = vector.shape_cast %68 : vector<1x8x128xbf16> to vector<8x128xbf16>
      %cst_57 = arith.constant dense<0.000000e+00> : vector<8x128xf32>
      %70 = tpu.matmul %69, %10, %cst_57 {dimension_numbers = #tpu.dot_dimension_numbers<[1], [0], [0], [1], [0, 0, 1, 1], [], []>} : vector<8x128xbf16>, vector<128x128xbf16>, vector<8x128xf32> -> vector<8x128xf32>
      %71 = vector.broadcast %11 : vector<1x128xf32> to vector<8x128xf32>
      %72 = arith.addf %70, %71 : vector<8x128xf32>
      %c7_58 = arith.constant 7 : index
      %c0_59 = arith.constant 0 : index
      %c0_60 = arith.constant 0 : index
      %73 = vector.load %arg12[%c7_58, %c0_59, %c0_60] : memref<8x8x128xf32, #tpu.memory_space<vmem>>, vector<1x8x128xf32>
      %74 = vector.shape_cast %73 : vector<1x8x128xf32> to vector<8x128xf32>
      %75 = vector.shape_cast %72 : vector<8x128xf32> to vector<1x8x128xf32>
      tpu.vector_store %arg12[%c7_58, %c0_59, %c0_60], %75 {strides = array<i32>} : memref<8x8x128xf32, #tpu.memory_space<vmem>>, vector<1x8x128xf32>,
      %c0_61 = arith.constant 0 : index
      %c0_62 = arith.constant 0 : index
      %76 = vector.load %arg6[%c0_61, %c0_62] : memref<128x128xbf16, #tpu.memory_space<vmem>>, vector<128x128xbf16>
      %c0_63 = arith.constant 0 : index
      %c0_64 = arith.constant 0 : index
      %77 = vector.load %arg3[%c0_63, %c0_64] : memref<8x1xi32, #tpu.memory_space<vmem>>, vector<8x1xi32>
      %78 = vector.shape_cast %77 : vector<8x1xi32> to vector<8x1xi32>
      %79 = vector.broadcast %78 : vector<8x1xi32> to vector<8x128xi32>
      %c0_65 = arith.constant 0 : index
      %c0_66 = arith.constant 0 : index
      %80 = vector.load %arg4[%c0_65, %c0_66] : memref<8x128xf32, #tpu.memory_space<vmem>>, vector<8x128xf32>
      %81 = arith.truncf %80 : vector<8x128xf32> to vector<8x128xbf16>
      %cst_67 = arith.constant dense<0.000000e+00> : vector<8x128xf32>
      %82 = tpu.matmul %81, %76, %cst_67 {dimension_numbers = #tpu.dot_dimension_numbers<[1], [0], [0], [1], [0, 0, 1, 1], [], []>} : vector<8x128xbf16>, vector<128x128xbf16>, vector<8x128xf32> -> vector<8x128xf32>
      %c0_68 = arith.constant 0 : index
      %c0_69 = arith.constant 0 : index
      %c0_70 = arith.constant 0 : index
      %83 = vector.load %arg12[%c0_68, %c0_69, %c0_70] : memref<8x8x128xf32, #tpu.memory_space<vmem>>, vector<1x8x128xf32>
      %84 = vector.shape_cast %83 : vector<1x8x128xf32> to vector<8x128xf32>
      %85 = arith.addf %82, %84 : vector<8x128xf32>
      %c0_i32_71 = arith.constant 0 : i32
      %86 = vector.broadcast %c0_i32_71 : i32 to vector<8x128xi32>
      %87 = arith.cmpi sgt, %79, %86 : vector<8x128xi32>
      %88 = math.tanh %85 : vector<8x128xf32>
      %89 = arith.select %87, %88, %80 : vector<8x128xi1>, vector<8x128xf32>
      %90 = arith.truncf %89 : vector<8x128xf32> to vector<8x128xbf16>
      %cst_72 = arith.constant dense<0.000000e+00> : vector<8x128xf32>
      %91 = tpu.matmul %90, %76, %cst_72 {dimension_numbers = #tpu.dot_dimension_numbers<[1], [0], [0], [1], [0, 0, 1, 1], [], []>} : vector<8x128xbf16>, vector<128x128xbf16>, vector<8x128xf32> -> vector<8x128xf32>
      %c1_73 = arith.constant 1 : index
      %c0_74 = arith.constant 0 : index
      %c0_75 = arith.constant 0 : index
      %92 = vector.load %arg12[%c1_73, %c0_74, %c0_75] : memref<8x8x128xf32, #tpu.memory_space<vmem>>, vector<1x8x128xf32>
      %93 = vector.shape_cast %92 : vector<1x8x128xf32> to vector<8x128xf32>
      %94 = arith.addf %91, %93 : vector<8x128xf32>
      %c1_i32 = arith.constant 1 : i32
      %95 = vector.broadcast %c1_i32 : i32 to vector<8x128xi32>
      %96 = arith.cmpi sgt, %79, %95 : vector<8x128xi32>
      %97 = math.tanh %94 : vector<8x128xf32>
      %98 = arith.select %96, %97, %89 : vector<8x128xi1>, vector<8x128xf32>
      %99 = arith.truncf %98 : vector<8x128xf32> to vector<8x128xbf16>
      %cst_76 = arith.constant dense<0.000000e+00> : vector<8x128xf32>
      %100 = tpu.matmul %99, %76, %cst_76 {dimension_numbers = #tpu.dot_dimension_numbers<[1], [0], [0], [1], [0, 0, 1, 1], [], []>} : vector<8x128xbf16>, vector<128x128xbf16>, vector<8x128xf32> -> vector<8x128xf32>
      %c2_77 = arith.constant 2 : index
      %c0_78 = arith.constant 0 : index
      %c0_79 = arith.constant 0 : index
      %101 = vector.load %arg12[%c2_77, %c0_78, %c0_79] : memref<8x8x128xf32, #tpu.memory_space<vmem>>, vector<1x8x128xf32>
      %102 = vector.shape_cast %101 : vector<1x8x128xf32> to vector<8x128xf32>
      %103 = arith.addf %100, %102 : vector<8x128xf32>
      %c2_i32 = arith.constant 2 : i32
      %104 = vector.broadcast %c2_i32 : i32 to vector<8x128xi32>
      %105 = arith.cmpi sgt, %79, %104 : vector<8x128xi32>
      %106 = math.tanh %103 : vector<8x128xf32>
      %107 = arith.select %105, %106, %98 : vector<8x128xi1>, vector<8x128xf32>
      %108 = arith.truncf %107 : vector<8x128xf32> to vector<8x128xbf16>
      %cst_80 = arith.constant dense<0.000000e+00> : vector<8x128xf32>
      %109 = tpu.matmul %108, %76, %cst_80 {dimension_numbers = #tpu.dot_dimension_numbers<[1], [0], [0], [1], [0, 0, 1, 1], [], []>} : vector<8x128xbf16>, vector<128x128xbf16>, vector<8x128xf32> -> vector<8x128xf32>
      %c3_81 = arith.constant 3 : index
      %c0_82 = arith.constant 0 : index
      %c0_83 = arith.constant 0 : index
      %110 = vector.load %arg12[%c3_81, %c0_82, %c0_83] : memref<8x8x128xf32, #tpu.memory_space<vmem>>, vector<1x8x128xf32>
      %111 = vector.shape_cast %110 : vector<1x8x128xf32> to vector<8x128xf32>
      %112 = arith.addf %109, %111 : vector<8x128xf32>
      %c3_i32 = arith.constant 3 : i32
      %113 = vector.broadcast %c3_i32 : i32 to vector<8x128xi32>
      %114 = arith.cmpi sgt, %79, %113 : vector<8x128xi32>
      %115 = math.tanh %112 : vector<8x128xf32>
      %116 = arith.select %114, %115, %107 : vector<8x128xi1>, vector<8x128xf32>
      %117 = arith.truncf %116 : vector<8x128xf32> to vector<8x128xbf16>
      %cst_84 = arith.constant dense<0.000000e+00> : vector<8x128xf32>
      %118 = tpu.matmul %117, %76, %cst_84 {dimension_numbers = #tpu.dot_dimension_numbers<[1], [0], [0], [1], [0, 0, 1, 1], [], []>} : vector<8x128xbf16>, vector<128x128xbf16>, vector<8x128xf32> -> vector<8x128xf32>
      %c4_85 = arith.constant 4 : index
      %c0_86 = arith.constant 0 : index
      %c0_87 = arith.constant 0 : index
      %119 = vector.load %arg12[%c4_85, %c0_86, %c0_87] : memref<8x8x128xf32, #tpu.memory_space<vmem>>, vector<1x8x128xf32>
      %120 = vector.shape_cast %119 : vector<1x8x128xf32> to vector<8x128xf32>
      %121 = arith.addf %118, %120 : vector<8x128xf32>
      %c4_i32 = arith.constant 4 : i32
      %122 = vector.broadcast %c4_i32 : i32 to vector<8x128xi32>
      %123 = arith.cmpi sgt, %79, %122 : vector<8x128xi32>
      %124 = math.tanh %121 : vector<8x128xf32>
      %125 = arith.select %123, %124, %116 : vector<8x128xi1>, vector<8x128xf32>
      %126 = arith.truncf %125 : vector<8x128xf32> to vector<8x128xbf16>
      %cst_88 = arith.constant dense<0.000000e+00> : vector<8x128xf32>
      %127 = tpu.matmul %126, %76, %cst_88 {dimension_numbers = #tpu.dot_dimension_numbers<[1], [0], [0], [1], [0, 0, 1, 1], [], []>} : vector<8x128xbf16>, vector<128x128xbf16>, vector<8x128xf32> -> vector<8x128xf32>
      %c5_89 = arith.constant 5 : index
      %c0_90 = arith.constant 0 : index
      %c0_91 = arith.constant 0 : index
      %128 = vector.load %arg12[%c5_89, %c0_90, %c0_91] : memref<8x8x128xf32, #tpu.memory_space<vmem>>, vector<1x8x128xf32>
      %129 = vector.shape_cast %128 : vector<1x8x128xf32> to vector<8x128xf32>
      %130 = arith.addf %127, %129 : vector<8x128xf32>
      %c5_i32 = arith.constant 5 : i32
      %131 = vector.broadcast %c5_i32 : i32 to vector<8x128xi32>
      %132 = arith.cmpi sgt, %79, %131 : vector<8x128xi32>
      %133 = math.tanh %130 : vector<8x128xf32>
      %134 = arith.select %132, %133, %125 : vector<8x128xi1>, vector<8x128xf32>
      %135 = arith.truncf %134 : vector<8x128xf32> to vector<8x128xbf16>
      %cst_92 = arith.constant dense<0.000000e+00> : vector<8x128xf32>
      %136 = tpu.matmul %135, %76, %cst_92 {dimension_numbers = #tpu.dot_dimension_numbers<[1], [0], [0], [1], [0, 0, 1, 1], [], []>} : vector<8x128xbf16>, vector<128x128xbf16>, vector<8x128xf32> -> vector<8x128xf32>
      %c6_93 = arith.constant 6 : index
      %c0_94 = arith.constant 0 : index
      %c0_95 = arith.constant 0 : index
      %137 = vector.load %arg12[%c6_93, %c0_94, %c0_95] : memref<8x8x128xf32, #tpu.memory_space<vmem>>, vector<1x8x128xf32>
      %138 = vector.shape_cast %137 : vector<1x8x128xf32> to vector<8x128xf32>
      %139 = arith.addf %136, %138 : vector<8x128xf32>
      %c6_i32 = arith.constant 6 : i32
      %140 = vector.broadcast %c6_i32 : i32 to vector<8x128xi32>
      %141 = arith.cmpi sgt, %79, %140 : vector<8x128xi32>
      %142 = math.tanh %139 : vector<8x128xf32>
      %143 = arith.select %141, %142, %134 : vector<8x128xi1>, vector<8x128xf32>
      %144 = arith.truncf %143 : vector<8x128xf32> to vector<8x128xbf16>
      %cst_96 = arith.constant dense<0.000000e+00> : vector<8x128xf32>
      %145 = tpu.matmul %144, %76, %cst_96 {dimension_numbers = #tpu.dot_dimension_numbers<[1], [0], [0], [1], [0, 0, 1, 1], [], []>} : vector<8x128xbf16>, vector<128x128xbf16>, vector<8x128xf32> -> vector<8x128xf32>
      %c7_97 = arith.constant 7 : index
      %c0_98 = arith.constant 0 : index
      %c0_99 = arith.constant 0 : index
      %146 = vector.load %arg12[%c7_97, %c0_98, %c0_99] : memref<8x8x128xf32, #tpu.memory_space<vmem>>, vector<1x8x128xf32>
      %147 = vector.shape_cast %146 : vector<1x8x128xf32> to vector<8x128xf32>
      %148 = arith.addf %145, %147 : vector<8x128xf32>
      %c7_i32 = arith.constant 7 : i32
      %149 = vector.broadcast %c7_i32 : i32 to vector<8x128xi32>
      %150 = arith.cmpi sgt, %79, %149 : vector<8x128xi32>
      %151 = math.tanh %148 : vector<8x128xf32>
      %152 = arith.select %150, %151, %143 : vector<8x128xi1>, vector<8x128xf32>
      %cst_100 = arith.constant 0.000000e+00 : f32
      %153 = vector.broadcast %cst_100 : f32 to vector<8x128xf32>
      %c0_101 = arith.constant 0 : index
      %c0_102 = arith.constant 0 : index
      %c0_103 = arith.constant 0 : index
      %154 = vector.load %arg8[%c0_101, %c0_102, %c0_103] : memref<8x128x128xbf16, #tpu.memory_space<vmem>>, vector<8x16x128xbf16>
      %155 = arith.extf %154 : vector<8x16x128xbf16> to vector<8x16x128xf32>
      %156 = vector.extract_strided_slice %152 {offsets = [0, 0], sizes = [8, 16], strides = [1, 1]} : vector<8x128xf32> to vector<8x16xf32>
      %157 = vector.shape_cast %156 : vector<8x16xf32> to vector<8x16x1xf32>
      %158 = vector.broadcast %157 : vector<8x16x1xf32> to vector<8x16x128xf32>
      %159 = arith.mulf %158, %155 : vector<8x16x128xf32>
      %cst_104 = arith.constant dense<0.000000e+00> : vector<8x128xf32>
      %160 = vector.multi_reduction <add>, %159, %cst_104 [1] : vector<8x16x128xf32> to vector<8x128xf32>
      %161 = arith.addf %153, %160 : vector<8x128xf32>
      %c0_105 = arith.constant 0 : index
      %c16 = arith.constant 16 : index
      %c0_106 = arith.constant 0 : index
      %162 = vector.load %arg8[%c0_105, %c16, %c0_106] : memref<8x128x128xbf16, #tpu.memory_space<vmem>>, vector<8x16x128xbf16>
      %163 = arith.extf %162 : vector<8x16x128xbf16> to vector<8x16x128xf32>
      %164 = vector.extract_strided_slice %152 {offsets = [0, 16], sizes = [8, 16], strides = [1, 1]} : vector<8x128xf32> to vector<8x16xf32>
      %165 = vector.shape_cast %164 : vector<8x16xf32> to vector<8x16x1xf32>
      %166 = vector.broadcast %165 : vector<8x16x1xf32> to vector<8x16x128xf32>
      %167 = arith.mulf %166, %163 : vector<8x16x128xf32>
      %cst_107 = arith.constant dense<0.000000e+00> : vector<8x128xf32>
      %168 = vector.multi_reduction <add>, %167, %cst_107 [1] : vector<8x16x128xf32> to vector<8x128xf32>
      %169 = arith.addf %161, %168 : vector<8x128xf32>
      %c0_108 = arith.constant 0 : index
      %c32 = arith.constant 32 : index
      %c0_109 = arith.constant 0 : index
      %170 = vector.load %arg8[%c0_108, %c32, %c0_109] : memref<8x128x128xbf16, #tpu.memory_space<vmem>>, vector<8x16x128xbf16>
      %171 = arith.extf %170 : vector<8x16x128xbf16> to vector<8x16x128xf32>
      %172 = vector.extract_strided_slice %152 {offsets = [0, 32], sizes = [8, 16], strides = [1, 1]} : vector<8x128xf32> to vector<8x16xf32>
      %173 = vector.shape_cast %172 : vector<8x16xf32> to vector<8x16x1xf32>
      %174 = vector.broadcast %173 : vector<8x16x1xf32> to vector<8x16x128xf32>
      %175 = arith.mulf %174, %171 : vector<8x16x128xf32>
      %cst_110 = arith.constant dense<0.000000e+00> : vector<8x128xf32>
      %176 = vector.multi_reduction <add>, %175, %cst_110 [1] : vector<8x16x128xf32> to vector<8x128xf32>
      %177 = arith.addf %169, %176 : vector<8x128xf32>
      %c0_111 = arith.constant 0 : index
      %c48 = arith.constant 48 : index
      %c0_112 = arith.constant 0 : index
      %178 = vector.load %arg8[%c0_111, %c48, %c0_112] : memref<8x128x128xbf16, #tpu.memory_space<vmem>>, vector<8x16x128xbf16>
      %179 = arith.extf %178 : vector<8x16x128xbf16> to vector<8x16x128xf32>
      %180 = vector.extract_strided_slice %152 {offsets = [0, 48], sizes = [8, 16], strides = [1, 1]} : vector<8x128xf32> to vector<8x16xf32>
      %181 = vector.shape_cast %180 : vector<8x16xf32> to vector<8x16x1xf32>
      %182 = vector.broadcast %181 : vector<8x16x1xf32> to vector<8x16x128xf32>
      %183 = arith.mulf %182, %179 : vector<8x16x128xf32>
      %cst_113 = arith.constant dense<0.000000e+00> : vector<8x128xf32>
      %184 = vector.multi_reduction <add>, %183, %cst_113 [1] : vector<8x16x128xf32> to vector<8x128xf32>
      %185 = arith.addf %177, %184 : vector<8x128xf32>
      %c0_114 = arith.constant 0 : index
      %c64 = arith.constant 64 : index
      %c0_115 = arith.constant 0 : index
      %186 = vector.load %arg8[%c0_114, %c64, %c0_115] : memref<8x128x128xbf16, #tpu.memory_space<vmem>>, vector<8x16x128xbf16>
      %187 = arith.extf %186 : vector<8x16x128xbf16> to vector<8x16x128xf32>
      %188 = vector.extract_strided_slice %152 {offsets = [0, 64], sizes = [8, 16], strides = [1, 1]} : vector<8x128xf32> to vector<8x16xf32>
      %189 = vector.shape_cast %188 : vector<8x16xf32> to vector<8x16x1xf32>
      %190 = vector.broadcast %189 : vector<8x16x1xf32> to vector<8x16x128xf32>
      %191 = arith.mulf %190, %187 : vector<8x16x128xf32>
      %cst_116 = arith.constant dense<0.000000e+00> : vector<8x128xf32>
      %192 = vector.multi_reduction <add>, %191, %cst_116 [1] : vector<8x16x128xf32> to vector<8x128xf32>
      %193 = arith.addf %185, %192 : vector<8x128xf32>
      %c0_117 = arith.constant 0 : index
      %c80 = arith.constant 80 : index
      %c0_118 = arith.constant 0 : index
      %194 = vector.load %arg8[%c0_117, %c80, %c0_118] : memref<8x128x128xbf16, #tpu.memory_space<vmem>>, vector<8x16x128xbf16>
      %195 = arith.extf %194 : vector<8x16x128xbf16> to vector<8x16x128xf32>
      %196 = vector.extract_strided_slice %152 {offsets = [0, 80], sizes = [8, 16], strides = [1, 1]} : vector<8x128xf32> to vector<8x16xf32>
      %197 = vector.shape_cast %196 : vector<8x16xf32> to vector<8x16x1xf32>
      %198 = vector.broadcast %197 : vector<8x16x1xf32> to vector<8x16x128xf32>
      %199 = arith.mulf %198, %195 : vector<8x16x128xf32>
      %cst_119 = arith.constant dense<0.000000e+00> : vector<8x128xf32>
      %200 = vector.multi_reduction <add>, %199, %cst_119 [1] : vector<8x16x128xf32> to vector<8x128xf32>
      %201 = arith.addf %193, %200 : vector<8x128xf32>
      %c0_120 = arith.constant 0 : index
      %c96 = arith.constant 96 : index
      %c0_121 = arith.constant 0 : index
      %202 = vector.load %arg8[%c0_120, %c96, %c0_121] : memref<8x128x128xbf16, #tpu.memory_space<vmem>>, vector<8x16x128xbf16>
      %203 = arith.extf %202 : vector<8x16x128xbf16> to vector<8x16x128xf32>
      %204 = vector.extract_strided_slice %152 {offsets = [0, 96], sizes = [8, 16], strides = [1, 1]} : vector<8x128xf32> to vector<8x16xf32>
      %205 = vector.shape_cast %204 : vector<8x16xf32> to vector<8x16x1xf32>
      %206 = vector.broadcast %205 : vector<8x16x1xf32> to vector<8x16x128xf32>
      %207 = arith.mulf %206, %203 : vector<8x16x128xf32>
      %cst_122 = arith.constant dense<0.000000e+00> : vector<8x128xf32>
      %208 = vector.multi_reduction <add>, %207, %cst_122 [1] : vector<8x16x128xf32> to vector<8x128xf32>
      %209 = arith.addf %201, %208 : vector<8x128xf32>
      %c0_123 = arith.constant 0 : index
      %c112 = arith.constant 112 : index
      %c0_124 = arith.constant 0 : index
      %210 = vector.load %arg8[%c0_123, %c112, %c0_124] : memref<8x128x128xbf16, #tpu.memory_space<vmem>>, vector<8x16x128xbf16>
      %211 = arith.extf %210 : vector<8x16x128xbf16> to vector<8x16x128xf32>
      %212 = vector.extract_strided_slice %152 {offsets = [0, 112], sizes = [8, 16], strides = [1, 1]} : vector<8x128xf32> to vector<8x16xf32>
      %213 = vector.shape_cast %212 : vector<8x16xf32> to vector<8x16x1xf32>
      %214 = vector.broadcast %213 : vector<8x16x1xf32> to vector<8x16x128xf32>
      %215 = arith.mulf %214, %211 : vector<8x16x128xf32>
      %cst_125 = arith.constant dense<0.000000e+00> : vector<8x128xf32>
      %216 = vector.multi_reduction <add>, %215, %cst_125 [1] : vector<8x16x128xf32> to vector<8x128xf32>
      %217 = arith.addf %209, %216 : vector<8x128xf32>
      %218 = arith.addf %152, %217 : vector<8x128xf32>
      %219 = arith.truncf %218 : vector<8x128xf32> to vector<8x128xbf16>
      %c0_126 = arith.constant 0 : index
      %c0_127 = arith.constant 0 : index
      %220 = vector.load %arg13[%c0_126, %c0_127] : memref<8x128xbf16, #tpu.memory_space<vmem>>, vector<8x128xbf16>
      tpu.vector_store %arg13[%c0_126, %c0_127], %219 {strides = array<i32>} : memref<8x128xbf16, #tpu.memory_space<vmem>>, vector<8x128xbf16>,
    } else {
    }
    %c0 = arith.constant 0 : index
    %c0_1 = arith.constant 0 : index
    %3 = vector.load %arg13[%c0, %c0_1] : memref<8x128xbf16, #tpu.memory_space<vmem>>, vector<8x128xbf16>
    %c0_2 = arith.constant 0 : index
    %c0_3 = arith.constant 0 : index
    %4 = vector.load %arg9[%c0_2, %c0_3] : memref<128x128xbf16, #tpu.memory_space<vmem>>, vector<128x128xbf16>
    %cst = arith.constant dense<0.000000e+00> : vector<8x128xf32>
    %5 = tpu.matmul %3, %4, %cst {dimension_numbers = #tpu.dot_dimension_numbers<[1], [0], [0], [1], [0, 0, 1, 1], [], []>} : vector<8x128xbf16>, vector<128x128xbf16>, vector<8x128xf32> -> vector<8x128xf32>
    %c0_4 = arith.constant 0 : index
    %c0_5 = arith.constant 0 : index
    %6 = vector.load %arg10[%c0_4, %c0_5] : memref<1x128xf32, #tpu.memory_space<vmem>>, vector<1x128xf32>
    %7 = vector.broadcast %6 : vector<1x128xf32> to vector<8x128xf32>
    %8 = arith.addf %5, %7 : vector<8x128xf32>
    %c0_6 = arith.constant 0 : index
    %c0_7 = arith.constant 0 : index
    %9 = vector.load %arg11[%c0_6, %c0_7] : memref<8x128xf32, #tpu.memory_space<vmem>>, vector<8x128xf32>
    tpu.vector_store %arg11[%c0_6, %c0_7], %8 {strides = array<i32>} : memref<8x128xf32, #tpu.memory_space<vmem>>, vector<8x128xf32>,
    return
  }
  func.func @transform_0(%arg0: i32, %arg1: i32) -> (i32, i32, i32) {
    %c0_i32 = arith.constant 0 : i32
    %c0_i32_0 = arith.constant 0 : i32
    %c0_i32_1 = arith.constant 0 : i32
    return %c0_i32, %arg0, %c0_i32_0 : i32, i32, i32
  }
  func.func @transform_1(%arg0: i32, %arg1: i32) -> (i32, i32) {
    %c0_i32 = arith.constant 0 : i32
    %c0_i32_0 = arith.constant 0 : i32
    return %arg0, %c0_i32 : i32, i32
  }
  func.func @transform_2(%arg0: i32, %arg1: i32) -> (i32, i32) {
    %c0_i32 = arith.constant 0 : i32
    %c0_i32_0 = arith.constant 0 : i32
    return %arg0, %c0_i32 : i32, i32
  }
  func.func @transform_3(%arg0: i32, %arg1: i32) -> (i32, i32) {
    %c0_i32 = arith.constant 0 : i32
    %c0_i32_0 = arith.constant 0 : i32
    %c0_i32_1 = arith.constant 0 : i32
    return %c0_i32, %c0_i32_0 : i32, i32
  }
  func.func @transform_4(%arg0: i32, %arg1: i32) -> (i32, i32) {
    %c0_i32 = arith.constant 0 : i32
    %c0_i32_0 = arith.constant 0 : i32
    %c0_i32_1 = arith.constant 0 : i32
    return %c0_i32, %c0_i32_0 : i32, i32
  }
  func.func @transform_5(%arg0: i32, %arg1: i32) -> (i32, i32) {
    %c0_i32 = arith.constant 0 : i32
    %c0_i32_0 = arith.constant 0 : i32
    %c0_i32_1 = arith.constant 0 : i32
    return %c0_i32, %c0_i32_0 : i32, i32
  }
  func.func @transform_6(%arg0: i32, %arg1: i32) -> (i32, i32, i32) {
    %c0_i32 = arith.constant 0 : i32
    %c0_i32_0 = arith.constant 0 : i32
    %c0_i32_1 = arith.constant 0 : i32
    return %arg0, %c0_i32, %c0_i32_0 : i32, i32, i32
  }
  func.func @transform_7(%arg0: i32, %arg1: i32) -> (i32, i32) {
    %c0_i32 = arith.constant 0 : i32
    %c0_i32_0 = arith.constant 0 : i32
    return %c0_i32, %arg1 : i32, i32
  }
  func.func @transform_8(%arg0: i32, %arg1: i32) -> (i32, i32) {
    %c0_i32 = arith.constant 0 : i32
    %c0_i32_0 = arith.constant 0 : i32
    return %c0_i32, %arg1 : i32, i32
  }
  func.func @transform_9(%arg0: i32, %arg1: i32) -> (i32, i32) {
    %c0_i32 = arith.constant 0 : i32
    return %arg0, %arg1 : i32, i32
  }
}

</mosaic_0001>

<llo_original>
// kernel: wwm_forward.1
$region0: #{wwm_forward.1}
  #allocation0 [shape = 'u32[]', space=smem, size = 0x4, offset = 0x4, fixed_abs, tag = 'smem constant byte address 0x4 - core index']
  #allocation1 [shape = 'u32[72,128]{1,0:T(1,128)}', space=vmem, size = 0x9000, scoped, tag = 'internal scratch']
  #allocation2 [shape = 'f32[8,8,128]{2,1,0:T(8,128)}', space=vmem, size = 0x8000, scoped, tag = 'scratch operand']
  #allocation3 [shape = 'bf16[8,128]{1,0:T(8,128)(2,1)}', space=vmem, size = 0x800, scoped, tag = 'scratch operand']
  %s0 = inlined_call_operand.vmem [shape: bf16[8,8,128], index: 0, kind: input, shape index: {}]
  %s1 = inlined_call_operand.vmem [shape: s32[8,1], index: 1, kind: input, shape index: {}]
  %s2 = inlined_call_operand.vmem [shape: f32[8,128], index: 2, kind: input, shape index: {}]
  %s3 = inlined_call_operand.vmem [shape: bf16[128,128], index: 3, kind: input, shape index: {}]
  %s4 = inlined_call_operand.vmem [shape: bf16[128,128], index: 4, kind: input, shape index: {}]
  %s5 = inlined_call_operand.vmem [shape: f32[1,128], index: 5, kind: input, shape index: {}]
  %s6 = inlined_call_operand.vmem [shape: bf16[8,128,128], index: 6, kind: input, shape index: {}]
  %s7 = inlined_call_operand.vmem [shape: bf16[128,128], index: 7, kind: input, shape index: {}]
  %s8 = inlined_call_operand.vmem [shape: f32[1,128], index: 8, kind: input, shape index: {}]
  %s9 = inlined_call_operand.vmem [shape: f32[8,128], index: 9, kind: output, shape index: {}]
  %s10 = sld [smem:[#allocation0]]
  $region50: #{wwm_forward.1} parent=0
    _
  %s12 = ssub.s32 1, %s10
  %s13 = scalar_select 0, %s12, %s10
  // Predicated region
  $region2: #{wwm_forward.1} parent=0 // pred_check
    _
  $region3: #{wwm_forward.1} parent=0 // pred_check_branch
    %15 = sbr.rel (0) target = $region5
  $region4: #{wwm_forward.1} parent=0 // pred_region
    _
  $region5: #{wwm_forward.1} parent=0 // pred_fallthru
    _
  // Predicated region
  $region6: #{wwm_forward.1} parent=0 // pred_check
    _
  $region7: #{wwm_forward.1} parent=0 // pred_check_branch
    %17 = sbr.rel (0) target = $region9
  $region8: #{wwm_forward.1} parent=0 // pred_region
    _
  $region9: #{wwm_forward.1} parent=0 // pred_fallthru
    _
  // Predicated region
  $region10: #{wwm_forward.1} parent=0 // pred_check
    _
  $region11: #{wwm_forward.1} parent=0 // pred_check_branch
    %19 = sbr.rel (0) target = $region13
  $region12: #{wwm_forward.1} parent=0 // pred_region
    _
  $region13: #{wwm_forward.1} parent=0 // pred_fallthru
    _
  // Predicated region
  $region14: #{wwm_forward.1} parent=0 // pred_check
    _
  $region15: #{wwm_forward.1} parent=0 // pred_check_branch
    %21 = sbr.rel (0) target = $region17
  $region16: #{wwm_forward.1} parent=0 // pred_region
    _
  $region17: #{wwm_forward.1} parent=0 // pred_fallthru
    _
  // Predicated region
  $region18: #{wwm_forward.1} parent=0 // pred_check
    _
  $region19: #{wwm_forward.1} parent=0 // pred_check_branch
    %23 = sbr.rel (0) target = $region21
  $region20: #{wwm_forward.1} parent=0 // pred_region
    _
  $region21: #{wwm_forward.1} parent=0 // pred_fallthru
    _
  // Predicated region
  $region22: #{wwm_forward.1} parent=0 // pred_check
    _
  $region23: #{wwm_forward.1} parent=0 // pred_check_branch
    %25 = sbr.rel (0) target = $region25
  $region24: #{wwm_forward.1} parent=0 // pred_region
    _
  $region25: #{wwm_forward.1} parent=0 // pred_fallthru
    _
  // Predicated region
  $region26: #{wwm_forward.1} parent=0 // pred_check
    _
  $region27: #{wwm_forward.1} parent=0 // pred_check_branch
    %27 = sbr.rel (0) target = $region29
  $region28: #{wwm_forward.1} parent=0 // pred_region
    _
  $region29: #{wwm_forward.1} parent=0 // pred_fallthru
    _
  // Predicated region
  $region30: #{wwm_forward.1} parent=0 // pred_check
    _
  $region31: #{wwm_forward.1} parent=0 // pred_check_branch
    %29 = sbr.rel (0) target = $region33
  $region32: #{wwm_forward.1} parent=0 // pred_region
    _
  $region33: #{wwm_forward.1} parent=0 // pred_fallthru
    _
  // Predicated region
  $region34: #{wwm_forward.1} parent=0 // pred_check
    _
  $region35: #{wwm_forward.1} parent=0 // pred_check_branch
    %31 = sbr.rel (0) target = $region37
  $region36: #{wwm_forward.1} parent=0 // pred_region
    _
  $region37: #{wwm_forward.1} parent=0 // pred_fallthru
    _
  %p32 = scmp.eq.s32.totalorder 0, 0
  // Predicated region
  $region38: #{wwm_forward.1} parent=0 // pred_check
    %p33 = pneg %p32
  $region39: #{wwm_forward.1} parent=0 // pred_check_branch
    %35 = sbr.rel (%p33) target = $region41
  $region40: #{wwm_forward.1} parent=0 // pred_region
    %v36 = vld [vmem:[%s3] sm:$0xf]
    %v37 = vld [vmem:[%s3 + $0x4] sm:$0xf]
    %v38 = vld [vmem:[%s3 + $0x8] sm:$0xf]
    %v39 = vld [vmem:[%s3 + $0xc] sm:$0xf]
    %v40 = vld [vmem:[%s3 + $0x10] sm:$0xf]
    %v41 = vld [vmem:[%s3 + $0x14] sm:$0xf]
    %v42 = vld [vmem:[%s3 + $0x18] sm:$0xf]
    %v43 = vld [vmem:[%s3 + $0x1c] sm:$0xf]
    %v44 = vld [vmem:[%s3 + $0x20] sm:$0xf]
    %v45 = vld [vmem:[%s3 + $0x24] sm:$0xf]
    %v46 = vld [vmem:[%s3 + $0x28] sm:$0xf]
    %v47 = vld [vmem:[%s3 + $0x2c] sm:$0xf]
    %v48 = vld [vmem:[%s3 + $0x30] sm:$0xf]
    %v49 = vld [vmem:[%s3 + $0x34] sm:$0xf]
    %v50 = vld [vmem:[%s3 + $0x38] sm:$0xf]
    %v51 = vld [vmem:[%s3 + $0x3c] sm:$0xf]
    %v52 = vld [vmem:[%s5] sm:$0x1]
    %v53 = vld [vmem:[%s0] sm:$0xf]
    %v55 = vperm.slane %v52, 0
    %v73 = vunpack.c.l.b16 %v36
    %v74 = vunpack.c.l.b16 %v37
    %v75 = vunpack.c.l.b16 %v38
    %v76 = vunpack.c.l.b16 %v39
    %v77 = vunpack.c.l.b16 %v40
    %v78 = vunpack.c.l.b16 %v41
    %v79 = vunpack.c.l.b16 %v42
    %v80 = vunpack.c.l.b16 %v43
    %v81 = vunpack.c.l.b16 %v44
    %v82 = vunpack.c.l.b16 %v45
    %v83 = vunpack.c.l.b16 %v46
    %v84 = vunpack.c.l.b16 %v47
    %v85 = vunpack.c.l.b16 %v48
    %v86 = vunpack.c.l.b16 %v49
    %v87 = vunpack.c.l.b16 %v50
    %v88 = vunpack.c.l.b16 %v51
    %v89 = vpack.c.b16 %v74, %v73
    %v90 = vpack.c.b16 %v76, %v75
    %v91 = vpack.c.b16 %v78, %v77
    %v92 = vpack.c.b16 %v80, %v79
    %v93 = vpack.c.b16 %v82, %v81
    %v94 = vpack.c.b16 %v84, %v83
    %v95 = vpack.c.b16 %v86, %v85
    %v96 = vpack.c.b16 %v88, %v87
    %105 = vmatpush.bf16.msra.mxu0 %v96
    %106 = vmatpush.bf16.msra.mxu0 %v95
    %107 = vmatpush.bf16.msra.mxu0 %v94
    %108 = vmatpush.bf16.msra.mxu0 %v93
    %109 = vmatpush.bf16.msra.mxu0 %v92
    %110 = vmatpush.bf16.msra.mxu0 %v91
    %111 = vmatpush.bf16.msra.mxu0 %v90
    %112 = vmatpush.bf16.msra.mxu0 %v89
    %113 = vmatmul.bf16.gmra.mxu0 %v53
    %v114 = vpop.f32.mrf.mxu0
    %v115 = vadd.f32 %v55, %v114
    %v116 = vpop.f32.mrf.mxu0
    %117 = vdwg.mxu0
    %118 = vst [vmem:[#allocation2] sm:$0xff] %v115
    %s119 = scalar_lea.vmem %s0, 4
    %v120 = vld [vmem:[%s119] sm:$0xf]
    %121 = vmatpush.bf16.msra.mxu0 %v96
    %122 = vmatpush.bf16.msra.mxu0 %v95
    %123 = vmatpush.bf16.msra.mxu0 %v94
    %124 = vmatpush.bf16.msra.mxu0 %v93
    %125 = vmatpush.bf16.msra.mxu0 %v92
    %126 = vmatpush.bf16.msra.mxu0 %v91
    %127 = vmatpush.bf16.msra.mxu0 %v90
    %128 = vmatpush.bf16.msra.mxu0 %v89
    %129 = vmatmul.bf16.gmra.mxu0 %v120
    %v130 = vpop.f32.mrf.mxu0
    %v131 = vadd.f32 %v55, %v130
    %v132 = vpop.f32.mrf.mxu0
    %133 = vdwg.mxu0
    %s134 = scalar_lea.vmem [#allocation2], 8
    %135 = vst [vmem:[%s134] sm:$0xff] %v131
    %s136 = scalar_lea.vmem %s0, 8
    %v137 = vld [vmem:[%s136] sm:$0xf]
    %138 = vmatpush.bf16.msra.mxu0 %v96
    %139 = vmatpush.bf16.msra.mxu0 %v95
    %140 = vmatpush.bf16.msra.mxu0 %v94
    %141 = vmatpush.bf16.msra.mxu0 %v93
    %142 = vmatpush.bf16.msra.mxu0 %v92
    %143 = vmatpush.bf16.msra.mxu0 %v91
    %144 = vmatpush.bf16.msra.mxu0 %v90
    %145 = vmatpush.bf16.msra.mxu0 %v89
    %146 = vmatmul.bf16.gmra.mxu0 %v137
    %v147 = vpop.f32.mrf.mxu0
    %v148 = vadd.f32 %v55, %v147
    %v149 = vpop.f32.mrf.mxu0
    %150 = vdwg.mxu0
    %s151 = scalar_lea.vmem [#allocation2], 16
    %152 = vst [vmem:[%s151] sm:$0xff] %v148
    %s153 = scalar_lea.vmem %s0, 12
    %v154 = vld [vmem:[%s153] sm:$0xf]
    %155 = vmatpush.bf16.msra.mxu0 %v96
    %156 = vmatpush.bf16.msra.mxu0 %v95
    %157 = vmatpush.bf16.msra.mxu0 %v94
    %158 = vmatpush.bf16.msra.mxu0 %v93
    %159 = vmatpush.bf16.msra.mxu0 %v92
    %160 = vmatpush.bf16.msra.mxu0 %v91
    %161 = vmatpush.bf16.msra.mxu0 %v90
    %162 = vmatpush.bf16.msra.mxu0 %v89
    %163 = vmatmul.bf16.gmra.mxu0 %v154
    %v164 = vpop.f32.mrf.mxu0
    %v165 = vadd.f32 %v55, %v164
    %v166 = vpop.f32.mrf.mxu0
    %167 = vdwg.mxu0
    %s168 = scalar_lea.vmem [#allocation2], 24
    %169 = vst [vmem:[%s168] sm:$0xff] %v165
    %s170 = scalar_lea.vmem %s0, 16
    %v171 = vld [vmem:[%s170] sm:$0xf]
    %172 = vmatpush.bf16.msra.mxu0 %v96
    %173 = vmatpush.bf16.msra.mxu0 %v95
    %174 = vmatpush.bf16.msra.mxu0 %v94
    %175 = vmatpush.bf16.msra.mxu0 %v93
    %176 = vmatpush.bf16.msra.mxu0 %v92
    %177 = vmatpush.bf16.msra.mxu0 %v91
    %178 = vmatpush.bf16.msra.mxu0 %v90
    %179 = vmatpush.bf16.msra.mxu0 %v89
    %180 = vmatmul.bf16.gmra.mxu0 %v171
    %v181 = vpop.f32.mrf.mxu0
    %v182 = vadd.f32 %v55, %v181
    %v183 = vpop.f32.mrf.mxu0
    %184 = vdwg.mxu0
    %s185 = scalar_lea.vmem [#allocation2], 32
    %186 = vst [vmem:[%s185] sm:$0xff] %v182
    %s187 = scalar_lea.vmem %s0, 20
    %v188 = vld [vmem:[%s187] sm:$0xf]
    %189 = vmatpush.bf16.msra.mxu0 %v96
    %190 = vmatpush.bf16.msra.mxu0 %v95
    %191 = vmatpush.bf16.msra.mxu0 %v94
    %192 = vmatpush.bf16.msra.mxu0 %v93
    %193 = vmatpush.bf16.msra.mxu0 %v92
    %194 = vmatpush.bf16.msra.mxu0 %v91
    %195 = vmatpush.bf16.msra.mxu0 %v90
    %196 = vmatpush.bf16.msra.mxu0 %v89
    %197 = vmatmul.bf16.gmra.mxu0 %v188
    %v198 = vpop.f32.mrf.mxu0
    %v199 = vadd.f32 %v55, %v198
    %v200 = vpop.f32.mrf.mxu0
    %201 = vdwg.mxu0
    %s202 = scalar_lea.vmem [#allocation2], 40
    %203 = vst [vmem:[%s202] sm:$0xff] %v199
    %s204 = scalar_lea.vmem %s0, 24
    %v205 = vld [vmem:[%s204] sm:$0xf]
    %206 = vmatpush.bf16.msra.mxu0 %v96
    %207 = vmatpush.bf16.msra.mxu0 %v95
    %208 = vmatpush.bf16.msra.mxu0 %v94
    %209 = vmatpush.bf16.msra.mxu0 %v93
    %210 = vmatpush.bf16.msra.mxu0 %v92
    %211 = vmatpush.bf16.msra.mxu0 %v91
    %212 = vmatpush.bf16.msra.mxu0 %v90
    %213 = vmatpush.bf16.msra.mxu0 %v89
    %214 = vmatmul.bf16.gmra.mxu0 %v205
    %v215 = vpop.f32.mrf.mxu0
    %v216 = vadd.f32 %v55, %v215
    %v217 = vpop.f32.mrf.mxu0
    %218 = vdwg.mxu0
    %s219 = scalar_lea.vmem [#allocation2], 48
    %220 = vst [vmem:[%s219] sm:$0xff] %v216
    %s221 = scalar_lea.vmem %s0, 28
    %v222 = vld [vmem:[%s221] sm:$0xf]
    %223 = vmatpush.bf16.msra.mxu0 %v96
    %224 = vmatpush.bf16.msra.mxu0 %v95
    %225 = vmatpush.bf16.msra.mxu0 %v94
    %226 = vmatpush.bf16.msra.mxu0 %v93
    %227 = vmatpush.bf16.msra.mxu0 %v92
    %228 = vmatpush.bf16.msra.mxu0 %v91
    %229 = vmatpush.bf16.msra.mxu0 %v90
    %230 = vmatpush.bf16.msra.mxu0 %v89
    %231 = vmatmul.bf16.gmra.mxu0 %v222
    %v232 = vpop.f32.mrf.mxu0
    %v233 = vadd.f32 %v55, %v232
    %v234 = vpop.f32.mrf.mxu0
    %235 = vdwg.mxu0
    %s236 = scalar_lea.vmem [#allocation2], 56
    %237 = vst [vmem:[%s236] sm:$0xff] %v233
    %v238 = vld [vmem:[%s4] sm:$0xf]
    %v239 = vld [vmem:[%s4 + $0x4] sm:$0xf]
    %v240 = vld [vmem:[%s4 + $0x8] sm:$0xf]
    %v241 = vld [vmem:[%s4 + $0xc] sm:$0xf]
    %v242 = vld [vmem:[%s4 + $0x10] sm:$0xf]
    %v243 = vld [vmem:[%s4 + $0x14] sm:$0xf]
    %v244 = vld [vmem:[%s4 + $0x18] sm:$0xf]
    %v245 = vld [vmem:[%s4 + $0x1c] sm:$0xf]
    %v246 = vld [vmem:[%s4 + $0x20] sm:$0xf]
    %v247 = vld [vmem:[%s4 + $0x24] sm:$0xf]
    %v248 = vld [vmem:[%s4 + $0x28] sm:$0xf]
    %v249 = vld [vmem:[%s4 + $0x2c] sm:$0xf]
    %v250 = vld [vmem:[%s4 + $0x30] sm:$0xf]
    %v251 = vld [vmem:[%s4 + $0x34] sm:$0xf]
    %v252 = vld [vmem:[%s4 + $0x38] sm:$0xf]
    %v253 = vld [vmem:[%s4 + $0x3c] sm:$0xf]
    %v254 = vld [vmem:[%s1] sm:$0xff]
    %255 = vset.pattern.permute.xlu0 0
    %256 = vperm.xlu0 %255, %v254
    %v257 = vpop.permute.xlu0 %256
    %v258 = vld [vmem:[%s2] sm:$0xff]
    %v259 = vpack.c.bf16 %v258, %v258
    %v260 = vld [vmem:[#allocation2] sm:$0xff]
    %v277 = vunpack.c.l.b16 %v238
    %v278 = vunpack.c.l.b16 %v239
    %v279 = vunpack.c.l.b16 %v240
    %v280 = vunpack.c.l.b16 %v241
    %v281 = vunpack.c.l.b16 %v242
    %v282 = vunpack.c.l.b16 %v243
    %v283 = vunpack.c.l.b16 %v244
    %v284 = vunpack.c.l.b16 %v245
    %v285 = vunpack.c.l.b16 %v246
    %v286 = vunpack.c.l.b16 %v247
    %v287 = vunpack.c.l.b16 %v248
    %v288 = vunpack.c.l.b16 %v249
    %v289 = vunpack.c.l.b16 %v250
    %v290 = vunpack.c.l.b16 %v251
    %v291 = vunpack.c.l.b16 %v252
    %v292 = vunpack.c.l.b16 %v253
    %v293 = vpack.c.b16 %v278, %v277
    %v294 = vpack.c.b16 %v280, %v279
    %v295 = vpack.c.b16 %v282, %v281
    %v296 = vpack.c.b16 %v284, %v283
    %v297 = vpack.c.b16 %v286, %v285
    %v298 = vpack.c.b16 %v288, %v287
    %v299 = vpack.c.b16 %v290, %v289
    %v300 = vpack.c.b16 %v292, %v291
    %309 = vmatpush.bf16.msra.mxu0 %v300
    %310 = vmatpush.bf16.msra.mxu0 %v299
    %311 = vmatpush.bf16.msra.mxu0 %v298
    %312 = vmatpush.bf16.msra.mxu0 %v297
    %313 = vmatpush.bf16.msra.mxu0 %v296
    %314 = vmatpush.bf16.msra.mxu0 %v295
    %315 = vmatpush.bf16.msra.mxu0 %v294
    %316 = vmatpush.bf16.msra.mxu0 %v293
    %317 = vmatmul.bf16.gmra.mxu0 %v259
    %v318 = vpop.f32.mrf.mxu0
    %v319 = vadd.f32 %v260, %v318
    %v320 = vpop.f32.mrf.mxu0
    %321 = vdwg.mxu0
    %vm322 = vcmp.gt.s32.totalorder %v257, 0
    %v323 = vtanh.pop %v319
    %v324 = vsel %vm322, %v323, %v258
    %v325 = vpack.c.bf16 %v324, %v324
    %v326 = vld [vmem:[%s134] sm:$0xff]
    %327 = vmatpush.bf16.msra.mxu0 %v300
    %328 = vmatpush.bf16.msra.mxu0 %v299
    %329 = vmatpush.bf16.msra.mxu0 %v298
    %330 = vmatpush.bf16.msra.mxu0 %v297
    %331 = vmatpush.bf16.msra.mxu0 %v296
    %332 = vmatpush.bf16.msra.mxu0 %v295
    %333 = vmatpush.bf16.msra.mxu0 %v294
    %334 = vmatpush.bf16.msra.mxu0 %v293
    %335 = vmatmul.bf16.gmra.mxu0 %v325
    %v336 = vpop.f32.mrf.mxu0
    %v337 = vadd.f32 %v326, %v336
    %v338 = vpop.f32.mrf.mxu0
    %339 = vdwg.mxu0
    %vm340 = vcmp.gt.s32.totalorder %v257, 1
    %v341 = vtanh.pop %v337
    %v342 = vsel %vm340, %v341, %v324
    %v343 = vpack.c.bf16 %v342, %v342
    %v344 = vld [vmem:[%s151] sm:$0xff]
    %345 = vmatpush.bf16.msra.mxu0 %v300
    %346 = vmatpush.bf16.msra.mxu0 %v299
    %347 = vmatpush.bf16.msra.mxu0 %v298
    %348 = vmatpush.bf16.msra.mxu0 %v297
    %349 = vmatpush.bf16.msra.mxu0 %v296
    %350 = vmatpush.bf16.msra.mxu0 %v295
    %351 = vmatpush.bf16.msra.mxu0 %v294
    %352 = vmatpush.bf16.msra.mxu0 %v293
    %353 = vmatmul.bf16.gmra.mxu0 %v343
    %v354 = vpop.f32.mrf.mxu0
    %v355 = vadd.f32 %v344, %v354
    %v356 = vpop.f32.mrf.mxu0
    %357 = vdwg.mxu0
    %vm358 = vcmp.gt.s32.totalorder %v257, 2
    %v359 = vtanh.pop %v355
    %v360 = vsel %vm358, %v359, %v342
    %v361 = vpack.c.bf16 %v360, %v360
    %v362 = vld [vmem:[%s168] sm:$0xff]
    %363 = vmatpush.bf16.msra.mxu0 %v300
    %364 = vmatpush.bf16.msra.mxu0 %v299
    %365 = vmatpush.bf16.msra.mxu0 %v298
    %366 = vmatpush.bf16.msra.mxu0 %v297
    %367 = vmatpush.bf16.msra.mxu0 %v296
    %368 = vmatpush.bf16.msra.mxu0 %v295
    %369 = vmatpush.bf16.msra.mxu0 %v294
    %370 = vmatpush.bf16.msra.mxu0 %v293
    %371 = vmatmul.bf16.gmra.mxu0 %v361
    %v372 = vpop.f32.mrf.mxu0
    %v373 = vadd.f32 %v362, %v372
    %v374 = vpop.f32.mrf.mxu0
    %375 = vdwg.mxu0
    %vm376 = vcmp.gt.s32.totalorder %v257, 3
    %v377 = vtanh.pop %v373
    %v378 = vsel %vm376, %v377, %v360
    %v379 = vpack.c.bf16 %v378, %v378
    %v380 = vld [vmem:[%s185] sm:$0xff]
    %381 = vmatpush.bf16.msra.mxu0 %v300
    %382 = vmatpush.bf16.msra.mxu0 %v299
    %383 = vmatpush.bf16.msra.mxu0 %v298
    %384 = vmatpush.bf16.msra.mxu0 %v297
    %385 = vmatpush.bf16.msra.mxu0 %v296
    %386 = vmatpush.bf16.msra.mxu0 %v295
    %387 = vmatpush.bf16.msra.mxu0 %v294
    %388 = vmatpush.bf16.msra.mxu0 %v293
    %389 = vmatmul.bf16.gmra.mxu0 %v379
    %v390 = vpop.f32.mrf.mxu0
    %v391 = vadd.f32 %v380, %v390
    %v392 = vpop.f32.mrf.mxu0
    %393 = vdwg.mxu0
    %vm394 = vcmp.gt.s32.totalorder %v257, 4
    %v395 = vtanh.pop %v391
    %v396 = vsel %vm394, %v395, %v378
    %v397 = vpack.c.bf16 %v396, %v396
    %v398 = vld [vmem:[%s202] sm:$0xff]
    %399 = vmatpush.bf16.msra.mxu0 %v300
    %400 = vmatpush.bf16.msra.mxu0 %v299
    %401 = vmatpush.bf16.msra.mxu0 %v298
    %402 = vmatpush.bf16.msra.mxu0 %v297
    %403 = vmatpush.bf16.msra.mxu0 %v296
    %404 = vmatpush.bf16.msra.mxu0 %v295
    %405 = vmatpush.bf16.msra.mxu0 %v294
    %406 = vmatpush.bf16.msra.mxu0 %v293
    %407 = vmatmul.bf16.gmra.mxu0 %v397
    %v408 = vpop.f32.mrf.mxu0
    %v409 = vadd.f32 %v398, %v408
    %v410 = vpop.f32.mrf.mxu0
    %411 = vdwg.mxu0
    %vm412 = vcmp.gt.s32.totalorder %v257, 5
    %v413 = vtanh.pop %v409
    %v414 = vsel %vm412, %v413, %v396
    %v415 = vpack.c.bf16 %v414, %v414
    %v416 = vld [vmem:[%s219] sm:$0xff]
    %417 = vmatpush.bf16.msra.mxu0 %v300
    %418 = vmatpush.bf16.msra.mxu0 %v299
    %419 = vmatpush.bf16.msra.mxu0 %v298
    %420 = vmatpush.bf16.msra.mxu0 %v297
    %421 = vmatpush.bf16.msra.mxu0 %v296
    %422 = vmatpush.bf16.msra.mxu0 %v295
    %423 = vmatpush.bf16.msra.mxu0 %v294
    %424 = vmatpush.bf16.msra.mxu0 %v293
    %425 = vmatmul.bf16.gmra.mxu0 %v415
    %v426 = vpop.f32.mrf.mxu0
    %v427 = vadd.f32 %v416, %v426
    %v428 = vpop.f32.mrf.mxu0
    %429 = vdwg.mxu0
    %vm430 = vcmp.gt.s32.totalorder %v257, 6
    %v431 = vtanh.pop %v427
    %v432 = vsel %vm430, %v431, %v414
    %v433 = vpack.c.bf16 %v432, %v432
    %v434 = vld [vmem:[%s236] sm:$0xff]
    %435 = vmatpush.bf16.msra.mxu0 %v300
    %436 = vmatpush.bf16.msra.mxu0 %v299
    %437 = vmatpush.bf16.msra.mxu0 %v298
    %438 = vmatpush.bf16.msra.mxu0 %v297
    %439 = vmatpush.bf16.msra.mxu0 %v296
    %440 = vmatpush.bf16.msra.mxu0 %v295
    %441 = vmatpush.bf16.msra.mxu0 %v294
    %442 = vmatpush.bf16.msra.mxu0 %v293
    %443 = vmatmul.bf16.gmra.mxu0 %v433
    %v444 = vpop.f32.mrf.mxu0
    %v445 = vadd.f32 %v434, %v444
    %v446 = vpop.f32.mrf.mxu0
    %447 = vdwg.mxu0
    %vm448 = vcmp.gt.s32.totalorder %v257, 7
    %v449 = vtanh.pop %v445
    %v450 = vsel %vm448, %v449, %v432
    %v451 = vld [vmem:[%s6] sm:$0xf]
    %v452 = vld [vmem:[%s6 + $0x4] sm:$0xf]
    %v453 = vld [vmem:[%s6 + $0x40] sm:$0xf]
    %v454 = vld [vmem:[%s6 + $0x44] sm:$0xf]
    %v455 = vld [vmem:[%s6 + $0x80] sm:$0xf]
    %v456 = vld [vmem:[%s6 + $0x84] sm:$0xf]
    %v457 = vld [vmem:[%s6 + $0xc0] sm:$0xf]
    %v458 = vld [vmem:[%s6 + $0xc4] sm:$0xf]
    %v459 = vld [vmem:[%s6 + $0x100] sm:$0xf]
    %v460 = vld [vmem:[%s6 + $0x104] sm:$0xf]
    %v461 = vld [vmem:[%s6 + $0x140] sm:$0xf]
    %v462 = vld [vmem:[%s6 + $0x144] sm:$0xf]
    %v463 = vld [vmem:[%s6 + $0x180] sm:$0xf]
    %v464 = vld [vmem:[%s6 + $0x184] sm:$0xf]
    %v465 = vld [vmem:[%s6 + $0x1c0] sm:$0xf]
    %v466 = vld [vmem:[%s6 + $0x1c4] sm:$0xf]
    %v467 = vunpack.c.l.bf16 %v451
    %v468 = vunpack.c.l.bf16 %v452
    %v469 = vunpack.c.l.bf16 %v453
    %v470 = vunpack.c.l.bf16 %v454
    %v471 = vunpack.c.l.bf16 %v455
    %v472 = vunpack.c.l.bf16 %v456
    %v473 = vunpack.c.l.bf16 %v457
    %v474 = vunpack.c.l.bf16 %v458
    %v475 = vunpack.c.l.bf16 %v459
    %v476 = vunpack.c.l.bf16 %v460
    %v477 = vunpack.c.l.bf16 %v461
    %v478 = vunpack.c.l.bf16 %v462
    %v479 = vunpack.c.l.bf16 %v463
    %v480 = vunpack.c.l.bf16 %v464
    %v481 = vunpack.c.l.bf16 %v465
    %v482 = vunpack.c.l.bf16 %v466
    %v483 = vperm.slane %v450, 0
    %v484 = vlaneseq
    %v485 = vshrl.u32 %v484, 7
    %487 = vset.pattern.permute.xlu0 %v485
    %488 = vperm.xlu0 %487, %v483
    %v489 = vpop.permute.xlu0 %488
    %v490 = vlaneseq
    %v491 = vshrl.u32 %v490, 7
    %v492 = vadd.s32 %v491, 8
    %493 = vset.pattern.permute.xlu0 %v492
    %494 = vperm.xlu0 %493, %v483
    %v495 = vpop.permute.xlu0 %494
    %v496 = vperm.slane %v450, 1
    %v497 = vlaneseq
    %v498 = vshrl.u32 %v497, 7
    %500 = vset.pattern.permute.xlu0 %v498
    %501 = vperm.xlu0 %500, %v496
    %v502 = vpop.permute.xlu0 %501
    %v503 = vlaneseq
    %v504 = vshrl.u32 %v503, 7
    %v505 = vadd.s32 %v504, 8
    %506 = vset.pattern.permute.xlu0 %v505
    %507 = vperm.xlu0 %506, %v496
    %v508 = vpop.permute.xlu0 %507
    %v509 = vperm.slane %v450, 2
    %v510 = vlaneseq
    %v511 = vshrl.u32 %v510, 7
    %513 = vset.pattern.permute.xlu0 %v511
    %514 = vperm.xlu0 %513, %v509
    %v515 = vpop.permute.xlu0 %514
    %v516 = vlaneseq
    %v517 = vshrl.u32 %v516, 7
    %v518 = vadd.s32 %v517, 8
    %519 = vset.pattern.permute.xlu0 %v518
    %520 = vperm.xlu0 %519, %v509
    %v521 = vpop.permute.xlu0 %520
    %v522 = vperm.slane %v450, 3
    %v523 = vlaneseq
    %v524 = vshrl.u32 %v523, 7
    %526 = vset.pattern.permute.xlu0 %v524
    %527 = vperm.xlu0 %526, %v522
    %v528 = vpop.permute.xlu0 %527
    %v529 = vlaneseq
    %v530 = vshrl.u32 %v529, 7
    %v531 = vadd.s32 %v530, 8
    %532 = vset.pattern.permute.xlu0 %v531
    %533 = vperm.xlu0 %532, %v522
    %v534 = vpop.permute.xlu0 %533
    %v535 = vperm.slane %v450, 4
    %v536 = vlaneseq
    %v537 = vshrl.u32 %v536, 7
    %539 = vset.pattern.permute.xlu0 %v537
    %540 = vperm.xlu0 %539, %v535
    %v541 = vpop.permute.xlu0 %540
    %v542 = vlaneseq
    %v543 = vshrl.u32 %v542, 7
    %v544 = vadd.s32 %v543, 8
    %545 = vset.pattern.permute.xlu0 %v544
    %546 = vperm.xlu0 %545, %v535
    %v547 = vpop.permute.xlu0 %546
    %v548 = vperm.slane %v450, 5
    %v549 = vlaneseq
    %v550 = vshrl.u32 %v549, 7
    %552 = vset.pattern.permute.xlu0 %v550
    %553 = vperm.xlu0 %552, %v548
    %v554 = vpop.permute.xlu0 %553
    %v555 = vlaneseq
    %v556 = vshrl.u32 %v555, 7
    %v557 = vadd.s32 %v556, 8
    %558 = vset.pattern.permute.xlu0 %v557
    %559 = vperm.xlu0 %558, %v548
    %v560 = vpop.permute.xlu0 %559
    %v561 = vperm.slane %v450, 6
    %v562 = vlaneseq
    %v563 = vshrl.u32 %v562, 7
    %565 = vset.pattern.permute.xlu0 %v563
    %566 = vperm.xlu0 %565, %v561
    %v567 = vpop.permute.xlu0 %566
    %v568 = vlaneseq
    %v569 = vshrl.u32 %v568, 7
    %v570 = vadd.s32 %v569, 8
    %571 = vset.pattern.permute.xlu0 %v570
    %572 = vperm.xlu0 %571, %v561
    %v573 = vpop.permute.xlu0 %572
    %v574 = vperm.slane %v450, 7
    %v575 = vlaneseq
    %v576 = vshrl.u32 %v575, 7
    %578 = vset.pattern.permute.xlu0 %v576
    %579 = vperm.xlu0 %578, %v574
    %v580 = vpop.permute.xlu0 %579
    %v581 = vlaneseq
    %v582 = vshrl.u32 %v581, 7
    %v583 = vadd.s32 %v582, 8
    %584 = vset.pattern.permute.xlu0 %v583
    %585 = vperm.xlu0 %584, %v574
    %v586 = vpop.permute.xlu0 %585
    %v587 = vmul.f32 %v489, %v467
    %v588 = vmul.f32 %v495, %v468
    %v589 = vmul.f32 %v502, %v469
    %v590 = vmul.f32 %v508, %v470
    %v591 = vmul.f32 %v515, %v471
    %v592 = vmul.f32 %v521, %v472
    %v593 = vmul.f32 %v528, %v473
    %v594 = vmul.f32 %v534, %v474
    %v595 = vmul.f32 %v541, %v475
    %v596 = vmul.f32 %v547, %v476
    %v597 = vmul.f32 %v554, %v477
    %v598 = vmul.f32 %v560, %v478
    %v599 = vmul.f32 %v567, %v479
    %v600 = vmul.f32 %v573, %v480
    %v601 = vmul.f32 %v580, %v481
    %v602 = vmul.f32 %v586, %v482
    %v603 = vadd.f32 %v587, %v588
    %v604 = vrot.slane %v603, 4
    %v605 = vadd.f32 %v603, %v604
    %v606 = vrot.slane %v605, 2
    %v607 = vadd.f32 %v605, %v606
    %v608 = vrot.slane %v607, 1
    %v609 = vadd.f32 %v607, %v608
    %v610 = vadd.f32 %v589, %v590
    %v611 = vrot.slane %v610, 4
    %v612 = vadd.f32 %v610, %v611
    %v613 = vrot.slane %v612, 2
    %v614 = vadd.f32 %v612, %v613
    %v615 = vrot.slane %v614, 1
    %v616 = vadd.f32 %v614, %v615
    %v617 = vadd.f32 %v591, %v592
    %v618 = vrot.slane %v617, 4
    %v619 = vadd.f32 %v617, %v618
    %v620 = vrot.slane %v619, 2
    %v621 = vadd.f32 %v619, %v620
    %v622 = vrot.slane %v621, 1
    %v623 = vadd.f32 %v621, %v622
    %v624 = vadd.f32 %v593, %v594
    %v625 = vrot.slane %v624, 4
    %v626 = vadd.f32 %v624, %v625
    %v627 = vrot.slane %v626, 2
    %v628 = vadd.f32 %v626, %v627
    %v629 = vrot.slane %v628, 1
    %v630 = vadd.f32 %v628, %v629
    %v631 = vadd.f32 %v595, %v596
    %v632 = vrot.slane %v631, 4
    %v633 = vadd.f32 %v631, %v632
    %v634 = vrot.slane %v633, 2
    %v635 = vadd.f32 %v633, %v634
    %v636 = vrot.slane %v635, 1
    %v637 = vadd.f32 %v635, %v636
    %v638 = vadd.f32 %v597, %v598
    %v639 = vrot.slane %v638, 4
    %v640 = vadd.f32 %v638, %v639
    %v641 = vrot.slane %v640, 2
    %v642 = vadd.f32 %v640, %v641
    %v643 = vrot.slane %v642, 1
    %v644 = vadd.f32 %v642, %v643
    %v645 = vadd.f32 %v599, %v600
    %v646 = vrot.slane %v645, 4
    %v647 = vadd.f32 %v645, %v646
    %v648 = vrot.slane %v647, 2
    %v649 = vadd.f32 %v647, %v648
    %v650 = vrot.slane %v649, 1
    %v651 = vadd.f32 %v649, %v650
    %v652 = vadd.f32 %v601, %v602
    %v653 = vrot.slane %v652, 4
    %v654 = vadd.f32 %v652, %v653
    %v655 = vrot.slane %v654, 2
    %v656 = vadd.f32 %v654, %v655
    %v657 = vrot.slane %v656, 1
    %v658 = vadd.f32 %v656, %v657
    %v659 = vadd.f32 %v609, 0.0
    %v660 = vadd.f32 %v616, 0.0
    %v661 = vadd.f32 %v623, 0.0
    %v662 = vadd.f32 %v630, 0.0
    %v663 = vadd.f32 %v637, 0.0
    %v664 = vadd.f32 %v644, 0.0
    %v665 = vadd.f32 %v651, 0.0
    %v666 = vadd.f32 %v658, 0.0
    %v667 = vld [vmem:[%s6 + $0x8] sm:$0xf]
    %v668 = vld [vmem:[%s6 + $0xc] sm:$0xf]
    %v669 = vld [vmem:[%s6 + $0x48] sm:$0xf]
    %v670 = vld [vmem:[%s6 + $0x4c] sm:$0xf]
    %v671 = vld [vmem:[%s6 + $0x88] sm:$0xf]
    %v672 = vld [vmem:[%s6 + $0x8c] sm:$0xf]
    %v673 = vld [vmem:[%s6 + $0xc8] sm:$0xf]
    %v674 = vld [vmem:[%s6 + $0xcc] sm:$0xf]
    %v675 = vld [vmem:[%s6 + $0x108] sm:$0xf]
    %v676 = vld [vmem:[%s6 + $0x10c] sm:$0xf]
    %v677 = vld [vmem:[%s6 + $0x148] sm:$0xf]
    %v678 = vld [vmem:[%s6 + $0x14c] sm:$0xf]
    %v679 = vld [vmem:[%s6 + $0x188] sm:$0xf]
    %v680 = vld [vmem:[%s6 + $0x18c] sm:$0xf]
    %v681 = vld [vmem:[%s6 + $0x1c8] sm:$0xf]
    %v682 = vld [vmem:[%s6 + $0x1cc] sm:$0xf]
    %v683 = vunpack.c.l.bf16 %v667
    %v684 = vunpack.c.l.bf16 %v668
    %v685 = vunpack.c.l.bf16 %v669
    %v686 = vunpack.c.l.bf16 %v670
    %v687 = vunpack.c.l.bf16 %v671
    %v688 = vunpack.c.l.bf16 %v672
    %v689 = vunpack.c.l.bf16 %v673
    %v690 = vunpack.c.l.bf16 %v674
    %v691 = vunpack.c.l.bf16 %v675
    %v692 = vunpack.c.l.bf16 %v676
    %v693 = vunpack.c.l.bf16 %v677
    %v694 = vunpack.c.l.bf16 %v678
    %v695 = vunpack.c.l.bf16 %v679
    %v696 = vunpack.c.l.bf16 %v680
    %v697 = vunpack.c.l.bf16 %v681
    %v698 = vunpack.c.l.bf16 %v682
    %v699 = vlaneseq
    %v700 = vshrl.u32 %v699, 7
    %v701 = vadd.s32 %v700, 16
    %702 = vset.pattern.permute.xlu0 %v701
    %703 = vperm.xlu0 %702, %v483
    %v704 = vpop.permute.xlu0 %703
    %v705 = vlaneseq
    %v706 = vshrl.u32 %v705, 7
    %v707 = vadd.s32 %v706, 24
    %708 = vset.pattern.permute.xlu0 %v707
    %709 = vperm.xlu0 %708, %v483
    %v710 = vpop.permute.xlu0 %709
    %v711 = vlaneseq
    %v712 = vshrl.u32 %v711, 7
    %v713 = vadd.s32 %v712, 16
    %714 = vset.pattern.permute.xlu0 %v713
    %715 = vperm.xlu0 %714, %v496
    %v716 = vpop.permute.xlu0 %715
    %v717 = vlaneseq
    %v718 = vshrl.u32 %v717, 7
    %v719 = vadd.s32 %v718, 24
    %720 = vset.pattern.permute.xlu0 %v719
    %721 = vperm.xlu0 %720, %v496
    %v722 = vpop.permute.xlu0 %721
    %v723 = vlaneseq
    %v724 = vshrl.u32 %v723, 7
    %v725 = vadd.s32 %v724, 16
    %726 = vset.pattern.permute.xlu0 %v725
    %727 = vperm.xlu0 %726, %v509
    %v728 = vpop.permute.xlu0 %727
    %v729 = vlaneseq
    %v730 = vshrl.u32 %v729, 7
    %v731 = vadd.s32 %v730, 24
    %732 = vset.pattern.permute.xlu0 %v731
    %733 = vperm.xlu0 %732, %v509
    %v734 = vpop.permute.xlu0 %733
    %v735 = vlaneseq
    %v736 = vshrl.u32 %v735, 7
    %v737 = vadd.s32 %v736, 16
    %738 = vset.pattern.permute.xlu0 %v737
    %739 = vperm.xlu0 %738, %v522
    %v740 = vpop.permute.xlu0 %739
    %v741 = vlaneseq
    %v742 = vshrl.u32 %v741, 7
    %v743 = vadd.s32 %v742, 24
    %744 = vset.pattern.permute.xlu0 %v743
    %745 = vperm.xlu0 %744, %v522
    %v746 = vpop.permute.xlu0 %745
    %v747 = vlaneseq
    %v748 = vshrl.u32 %v747, 7
    %v749 = vadd.s32 %v748, 16
    %750 = vset.pattern.permute.xlu0 %v749
    %751 = vperm.xlu0 %750, %v535
    %v752 = vpop.permute.xlu0 %751
    %v753 = vlaneseq
    %v754 = vshrl.u32 %v753, 7
    %v755 = vadd.s32 %v754, 24
    %756 = vset.pattern.permute.xlu0 %v755
    %757 = vperm.xlu0 %756, %v535
    %v758 = vpop.permute.xlu0 %757
    %v759 = vlaneseq
    %v760 = vshrl.u32 %v759, 7
    %v761 = vadd.s32 %v760, 16
    %762 = vset.pattern.permute.xlu0 %v761
    %763 = vperm.xlu0 %762, %v548
    %v764 = vpop.permute.xlu0 %763
    %v765 = vlaneseq
    %v766 = vshrl.u32 %v765, 7
    %v767 = vadd.s32 %v766, 24
    %768 = vset.pattern.permute.xlu0 %v767
    %769 = vperm.xlu0 %768, %v548
    %v770 = vpop.permute.xlu0 %769
    %v771 = vlaneseq
    %v772 = vshrl.u32 %v771, 7
    %v773 = vadd.s32 %v772, 16
    %774 = vset.pattern.permute.xlu0 %v773
    %775 = vperm.xlu0 %774, %v561
    %v776 = vpop.permute.xlu0 %775
    %v777 = vlaneseq
    %v778 = vshrl.u32 %v777, 7
    %v779 = vadd.s32 %v778, 24
    %780 = vset.pattern.permute.xlu0 %v779
    %781 = vperm.xlu0 %780, %v561
    %v782 = vpop.permute.xlu0 %781
    %v783 = vlaneseq
    %v784 = vshrl.u32 %v783, 7
    %v785 = vadd.s32 %v784, 16
    %786 = vset.pattern.permute.xlu0 %v785
    %787 = vperm.xlu0 %786, %v574
    %v788 = vpop.permute.xlu0 %787
    %v789 = vlaneseq
    %v790 = vshrl.u32 %v789, 7
    %v791 = vadd.s32 %v790, 24
    %792 = vset.pattern.permute.xlu0 %v791
    %793 = vperm.xlu0 %792, %v574
    %v794 = vpop.permute.xlu0 %793
    %v795 = vmul.f32 %v704, %v683
    %v796 = vmul.f32 %v710, %v684
    %v797 = vmul.f32 %v716, %v685
    %v798 = vmul.f32 %v722, %v686
    %v799 = vmul.f32 %v728, %v687
    %v800 = vmul.f32 %v734, %v688
    %v801 = vmul.f32 %v740, %v689
    %v802 = vmul.f32 %v746, %v690
    %v803 = vmul.f32 %v752, %v691
    %v804 = vmul.f32 %v758, %v692
    %v805 = vmul.f32 %v764, %v693
    %v806 = vmul.f32 %v770, %v694
    %v807 = vmul.f32 %v776, %v695
    %v808 = vmul.f32 %v782, %v696
    %v809 = vmul.f32 %v788, %v697
    %v810 = vmul.f32 %v794, %v698
    %v811 = vadd.f32 %v795, %v796
    %v812 = vrot.slane %v811, 4
    %v813 = vadd.f32 %v811, %v812
    %v814 = vrot.slane %v813, 2
    %v815 = vadd.f32 %v813, %v814
    %v816 = vrot.slane %v815, 1
    %v817 = vadd.f32 %v815, %v816
    %v818 = vadd.f32 %v797, %v798
    %v819 = vrot.slane %v818, 4
    %v820 = vadd.f32 %v818, %v819
    %v821 = vrot.slane %v820, 2
    %v822 = vadd.f32 %v820, %v821
    %v823 = vrot.slane %v822, 1
    %v824 = vadd.f32 %v822, %v823
    %v825 = vadd.f32 %v799, %v800
    %v826 = vrot.slane %v825, 4
    %v827 = vadd.f32 %v825, %v826
    %v828 = vrot.slane %v827, 2
    %v829 = vadd.f32 %v827, %v828
    %v830 = vrot.slane %v829, 1
    %v831 = vadd.f32 %v829, %v830
    %v832 = vadd.f32 %v801, %v802
    %v833 = vrot.slane %v832, 4
    %v834 = vadd.f32 %v832, %v833
    %v835 = vrot.slane %v834, 2
    %v836 = vadd.f32 %v834, %v835
    %v837 = vrot.slane %v836, 1
    %v838 = vadd.f32 %v836, %v837
    %v839 = vadd.f32 %v803, %v804
    %v840 = vrot.slane %v839, 4
    %v841 = vadd.f32 %v839, %v840
    %v842 = vrot.slane %v841, 2
    %v843 = vadd.f32 %v841, %v842
    %v844 = vrot.slane %v843, 1
    %v845 = vadd.f32 %v843, %v844
    %v846 = vadd.f32 %v805, %v806
    %v847 = vrot.slane %v846, 4
    %v848 = vadd.f32 %v846, %v847
    %v849 = vrot.slane %v848, 2
    %v850 = vadd.f32 %v848, %v849
    %v851 = vrot.slane %v850, 1
    %v852 = vadd.f32 %v850, %v851
    %v853 = vadd.f32 %v807, %v808
    %v854 = vrot.slane %v853, 4
    %v855 = vadd.f32 %v853, %v854
    %v856 = vrot.slane %v855, 2
    %v857 = vadd.f32 %v855, %v856
    %v858 = vrot.slane %v857, 1
    %v859 = vadd.f32 %v857, %v858
    %v860 = vadd.f32 %v809, %v810
    %v861 = vrot.slane %v860, 4
    %v862 = vadd.f32 %v860, %v861
    %v863 = vrot.slane %v862, 2
    %v864 = vadd.f32 %v862, %v863
    %v865 = vrot.slane %v864, 1
    %v866 = vadd.f32 %v864, %v865
    %v867 = vadd.f32 %v659, %v817
    %v868 = vadd.f32 %v660, %v824
    %v869 = vadd.f32 %v661, %v831
    %v870 = vadd.f32 %v662, %v838
    %v871 = vadd.f32 %v663, %v845
    %v872 = vadd.f32 %v664, %v852
    %v873 = vadd.f32 %v665, %v859
    %v874 = vadd.f32 %v666, %v866
    %v875 = vld [vmem:[%s6 + $0x10] sm:$0xf]
    %v876 = vld [vmem:[%s6 + $0x14] sm:$0xf]
    %v877 = vld [vmem:[%s6 + $0x50] sm:$0xf]
    %v878 = vld [vmem:[%s6 + $0x54] sm:$0xf]
    %v879 = vld [vmem:[%s6 + $0x90] sm:$0xf]
    %v880 = vld [vmem:[%s6 + $0x94] sm:$0xf]
    %v881 = vld [vmem:[%s6 + $0xd0] sm:$0xf]
    %v882 = vld [vmem:[%s6 + $0xd4] sm:$0xf]
    %v883 = vld [vmem:[%s6 + $0x110] sm:$0xf]
    %v884 = vld [vmem:[%s6 + $0x114] sm:$0xf]
    %v885 = vld [vmem:[%s6 + $0x150] sm:$0xf]
    %v886 = vld [vmem:[%s6 + $0x154] sm:$0xf]
    %v887 = vld [vmem:[%s6 + $0x190] sm:$0xf]
    %v888 = vld [vmem:[%s6 + $0x194] sm:$0xf]
    %v889 = vld [vmem:[%s6 + $0x1d0] sm:$0xf]
    %v890 = vld [vmem:[%s6 + $0x1d4] sm:$0xf]
    %v891 = vunpack.c.l.bf16 %v875
    %v892 = vunpack.c.l.bf16 %v876
    %v893 = vunpack.c.l.bf16 %v877
    %v894 = vunpack.c.l.bf16 %v878
    %v895 = vunpack.c.l.bf16 %v879
    %v896 = vunpack.c.l.bf16 %v880
    %v897 = vunpack.c.l.bf16 %v881
    %v898 = vunpack.c.l.bf16 %v882
    %v899 = vunpack.c.l.bf16 %v883
    %v900 = vunpack.c.l.bf16 %v884
    %v901 = vunpack.c.l.bf16 %v885
    %v902 = vunpack.c.l.bf16 %v886
    %v903 = vunpack.c.l.bf16 %v887
    %v904 = vunpack.c.l.bf16 %v888
    %v905 = vunpack.c.l.bf16 %v889
    %v906 = vunpack.c.l.bf16 %v890
    %v907 = vlaneseq
    %v908 = vshrl.u32 %v907, 7
    %v909 = vadd.s32 %v908, 32
    %910 = vset.pattern.permute.xlu0 %v909
    %911 = vperm.xlu0 %910, %v483
    %v912 = vpop.permute.xlu0 %911
    %v913 = vlaneseq
    %v914 = vshrl.u32 %v913, 7
    %v915 = vadd.s32 %v914, 40
    %916 = vset.pattern.permute.xlu0 %v915
    %917 = vperm.xlu0 %916, %v483
    %v918 = vpop.permute.xlu0 %917
    %v919 = vlaneseq
    %v920 = vshrl.u32 %v919, 7
    %v921 = vadd.s32 %v920, 32
    %922 = vset.pattern.permute.xlu0 %v921
    %923 = vperm.xlu0 %922, %v496
    %v924 = vpop.permute.xlu0 %923
    %v925 = vlaneseq
    %v926 = vshrl.u32 %v925, 7
    %v927 = vadd.s32 %v926, 40
    %928 = vset.pattern.permute.xlu0 %v927
    %929 = vperm.xlu0 %928, %v496
    %v930 = vpop.permute.xlu0 %929
    %v931 = vlaneseq
    %v932 = vshrl.u32 %v931, 7
    %v933 = vadd.s32 %v932, 32
    %934 = vset.pattern.permute.xlu0 %v933
    %935 = vperm.xlu0 %934, %v509
    %v936 = vpop.permute.xlu0 %935
    %v937 = vlaneseq
    %v938 = vshrl.u32 %v937, 7
    %v939 = vadd.s32 %v938, 40
    %940 = vset.pattern.permute.xlu0 %v939
    %941 = vperm.xlu0 %940, %v509
    %v942 = vpop.permute.xlu0 %941
    %v943 = vlaneseq
    %v944 = vshrl.u32 %v943, 7
    %v945 = vadd.s32 %v944, 32
    %946 = vset.pattern.permute.xlu0 %v945
    %947 = vperm.xlu0 %946, %v522
    %v948 = vpop.permute.xlu0 %947
    %v949 = vlaneseq
    %v950 = vshrl.u32 %v949, 7
    %v951 = vadd.s32 %v950, 40
    %952 = vset.pattern.permute.xlu0 %v951
    %953 = vperm.xlu0 %952, %v522
    %v954 = vpop.permute.xlu0 %953
    %v955 = vlaneseq
    %v956 = vshrl.u32 %v955, 7
    %v957 = vadd.s32 %v956, 32
    %958 = vset.pattern.permute.xlu0 %v957
    %959 = vperm.xlu0 %958, %v535
    %v960 = vpop.permute.xlu0 %959
    %v961 = vlaneseq
    %v962 = vshrl.u32 %v961, 7
    %v963 = vadd.s32 %v962, 40
    %964 = vset.pattern.permute.xlu0 %v963
    %965 = vperm.xlu0 %964, %v535
    %v966 = vpop.permute.xlu0 %965
    %v967 = vlaneseq
    %v968 = vshrl.u32 %v967, 7
    %v969 = vadd.s32 %v968, 32
    %970 = vset.pattern.permute.xlu0 %v969
    %971 = vperm.xlu0 %970, %v548
    %v972 = vpop.permute.xlu0 %971
    %v973 = vlaneseq
    %v974 = vshrl.u32 %v973, 7
    %v975 = vadd.s32 %v974, 40
    %976 = vset.pattern.permute.xlu0 %v975
    %977 = vperm.xlu0 %976, %v548
    %v978 = vpop.permute.xlu0 %977
    %v979 = vlaneseq
    %v980 = vshrl.u32 %v979, 7
    %v981 = vadd.s32 %v980, 32
    %982 = vset.pattern.permute.xlu0 %v981
    %983 = vperm.xlu0 %982, %v561
    %v984 = vpop.permute.xlu0 %983
    %v985 = vlaneseq
    %v986 = vshrl.u32 %v985, 7
    %v987 = vadd.s32 %v986, 40
    %988 = vset.pattern.permute.xlu0 %v987
    %989 = vperm.xlu0 %988, %v561
    %v990 = vpop.permute.xlu0 %989
    %v991 = vlaneseq
    %v992 = vshrl.u32 %v991, 7
    %v993 = vadd.s32 %v992, 32
    %994 = vset.pattern.permute.xlu0 %v993
    %995 = vperm.xlu0 %994, %v574
    %v996 = vpop.permute.xlu0 %995
    %v997 = vlaneseq
    %v998 = vshrl.u32 %v997, 7
    %v999 = vadd.s32 %v998, 40
    %1000 = vset.pattern.permute.xlu0 %v999
    %1001 = vperm.xlu0 %1000, %v574
    %v1002 = vpop.permute.xlu0 %1001
    %v1003 = vmul.f32 %v912, %v891
    %v1004 = vmul.f32 %v918, %v892
    %v1005 = vmul.f32 %v924, %v893
    %v1006 = vmul.f32 %v930, %v894
    %v1007 = vmul.f32 %v936, %v895
    %v1008 = vmul.f32 %v942, %v896
    %v1009 = vmul.f32 %v948, %v897
    %v1010 = vmul.f32 %v954, %v898
    %v1011 = vmul.f32 %v960, %v899
    %v1012 = vmul.f32 %v966, %v900
    %v1013 = vmul.f32 %v972, %v901
    %v1014 = vmul.f32 %v978, %v902
    %v1015 = vmul.f32 %v984, %v903
    %v1016 = vmul.f32 %v990, %v904
    %v1017 = vmul.f32 %v996, %v905
    %v1018 = vmul.f32 %v1002, %v906
    %v1019 = vadd.f32 %v1003, %v1004
    %v1020 = vrot.slane %v1019, 4
    %v1021 = vadd.f32 %v1019, %v1020
    %v1022 = vrot.slane %v1021, 2
    %v1023 = vadd.f32 %v1021, %v1022
    %v1024 = vrot.slane %v1023, 1
    %v1025 = vadd.f32 %v1023, %v1024
    %v1026 = vadd.f32 %v1005, %v1006
    %v1027 = vrot.slane %v1026, 4
    %v1028 = vadd.f32 %v1026, %v1027
    %v1029 = vrot.slane %v1028, 2
    %v1030 = vadd.f32 %v1028, %v1029
    %v1031 = vrot.slane %v1030, 1
    %v1032 = vadd.f32 %v1030, %v1031
    %v1033 = vadd.f32 %v1007, %v1008
    %v1034 = vrot.slane %v1033, 4
    %v1035 = vadd.f32 %v1033, %v1034
    %v1036 = vrot.slane %v1035, 2
    %v1037 = vadd.f32 %v1035, %v1036
    %v1038 = vrot.slane %v1037, 1
    %v1039 = vadd.f32 %v1037, %v1038
    %v1040 = vadd.f32 %v1009, %v1010
    %v1041 = vrot.slane %v1040, 4
    %v1042 = vadd.f32 %v1040, %v1041
    %v1043 = vrot.slane %v1042, 2
    %v1044 = vadd.f32 %v1042, %v1043
    %v1045 = vrot.slane %v1044, 1
    %v1046 = vadd.f32 %v1044, %v1045
    %v1047 = vadd.f32 %v1011, %v1012
    %v1048 = vrot.slane %v1047, 4
    %v1049 = vadd.f32 %v1047, %v1048
    %v1050 = vrot.slane %v1049, 2
    %v1051 = vadd.f32 %v1049, %v1050
    %v1052 = vrot.slane %v1051, 1
    %v1053 = vadd.f32 %v1051, %v1052
    %v1054 = vadd.f32 %v1013, %v1014
    %v1055 = vrot.slane %v1054, 4
    %v1056 = vadd.f32 %v1054, %v1055
    %v1057 = vrot.slane %v1056, 2
    %v1058 = vadd.f32 %v1056, %v1057
    %v1059 = vrot.slane %v1058, 1
    %v1060 = vadd.f32 %v1058, %v1059
    %v1061 = vadd.f32 %v1015, %v1016
    %v1062 = vrot.slane %v1061, 4
    %v1063 = vadd.f32 %v1061, %v1062
    %v1064 = vrot.slane %v1063, 2
    %v1065 = vadd.f32 %v1063, %v1064
    %v1066 = vrot.slane %v1065, 1
    %v1067 = vadd.f32 %v1065, %v1066
    %v1068 = vadd.f32 %v1017, %v1018
    %v1069 = vrot.slane %v1068, 4
    %v1070 = vadd.f32 %v1068, %v1069
    %v1071 = vrot.slane %v1070, 2
    %v1072 = vadd.f32 %v1070, %v1071
    %v1073 = vrot.slane %v1072, 1
    %v1074 = vadd.f32 %v1072, %v1073
    %v1075 = vadd.f32 %v867, %v1025
    %v1076 = vadd.f32 %v868, %v1032
    %v1077 = vadd.f32 %v869, %v1039
    %v1078 = vadd.f32 %v870, %v1046
    %v1079 = vadd.f32 %v871, %v1053
    %v1080 = vadd.f32 %v872, %v1060
    %v1081 = vadd.f32 %v873, %v1067
    %v1082 = vadd.f32 %v874, %v1074
    %v1083 = vld [vmem:[%s6 + $0x18] sm:$0xf]
    %v1084 = vld [vmem:[%s6 + $0x1c] sm:$0xf]
    %v1085 = vld [vmem:[%s6 + $0x58] sm:$0xf]
    %v1086 = vld [vmem:[%s6 + $0x5c] sm:$0xf]
    %v1087 = vld [vmem:[%s6 + $0x98] sm:$0xf]
    %v1088 = vld [vmem:[%s6 + $0x9c] sm:$0xf]
    %v1089 = vld [vmem:[%s6 + $0xd8] sm:$0xf]
    %v1090 = vld [vmem:[%s6 + $0xdc] sm:$0xf]
    %v1091 = vld [vmem:[%s6 + $0x118] sm:$0xf]
    %v1092 = vld [vmem:[%s6 + $0x11c] sm:$0xf]
    %v1093 = vld [vmem:[%s6 + $0x158] sm:$0xf]
    %v1094 = vld [vmem:[%s6 + $0x15c] sm:$0xf]
    %v1095 = vld [vmem:[%s6 + $0x198] sm:$0xf]
    %v1096 = vld [vmem:[%s6 + $0x19c] sm:$0xf]
    %v1097 = vld [vmem:[%s6 + $0x1d8] sm:$0xf]
    %v1098 = vld [vmem:[%s6 + $0x1dc] sm:$0xf]
    %v1099 = vunpack.c.l.bf16 %v1083
    %v1100 = vunpack.c.l.bf16 %v1084
    %v1101 = vunpack.c.l.bf16 %v1085
    %v1102 = vunpack.c.l.bf16 %v1086
    %v1103 = vunpack.c.l.bf16 %v1087
    %v1104 = vunpack.c.l.bf16 %v1088
    %v1105 = vunpack.c.l.bf16 %v1089
    %v1106 = vunpack.c.l.bf16 %v1090
    %v1107 = vunpack.c.l.bf16 %v1091
    %v1108 = vunpack.c.l.bf16 %v1092
    %v1109 = vunpack.c.l.bf16 %v1093
    %v1110 = vunpack.c.l.bf16 %v1094
    %v1111 = vunpack.c.l.bf16 %v1095
    %v1112 = vunpack.c.l.bf16 %v1096
    %v1113 = vunpack.c.l.bf16 %v1097
    %v1114 = vunpack.c.l.bf16 %v1098
    %v1115 = vlaneseq
    %v1116 = vshrl.u32 %v1115, 7
    %v1117 = vadd.s32 %v1116, 48
    %1118 = vset.pattern.permute.xlu0 %v1117
    %1119 = vperm.xlu0 %1118, %v483
    %v1120 = vpop.permute.xlu0 %1119
    %v1121 = vlaneseq
    %v1122 = vshrl.u32 %v1121, 7
    %v1123 = vadd.s32 %v1122, 56
    %1124 = vset.pattern.permute.xlu0 %v1123
    %1125 = vperm.xlu0 %1124, %v483
    %v1126 = vpop.permute.xlu0 %1125
    %v1127 = vlaneseq
    %v1128 = vshrl.u32 %v1127, 7
    %v1129 = vadd.s32 %v1128, 48
    %1130 = vset.pattern.permute.xlu0 %v1129
    %1131 = vperm.xlu0 %1130, %v496
    %v1132 = vpop.permute.xlu0 %1131
    %v1133 = vlaneseq
    %v1134 = vshrl.u32 %v1133, 7
    %v1135 = vadd.s32 %v1134, 56
    %1136 = vset.pattern.permute.xlu0 %v1135
    %1137 = vperm.xlu0 %1136, %v496
    %v1138 = vpop.permute.xlu0 %1137
    %v1139 = vlaneseq
    %v1140 = vshrl.u32 %v1139, 7
    %v1141 = vadd.s32 %v1140, 48
    %1142 = vset.pattern.permute.xlu0 %v1141
    %1143 = vperm.xlu0 %1142, %v509
    %v1144 = vpop.permute.xlu0 %1143
    %v1145 = vlaneseq
    %v1146 = vshrl.u32 %v1145, 7
    %v1147 = vadd.s32 %v1146, 56
    %1148 = vset.pattern.permute.xlu0 %v1147
    %1149 = vperm.xlu0 %1148, %v509
    %v1150 = vpop.permute.xlu0 %1149
    %v1151 = vlaneseq
    %v1152 = vshrl.u32 %v1151, 7
    %v1153 = vadd.s32 %v1152, 48
    %1154 = vset.pattern.permute.xlu0 %v1153
    %1155 = vperm.xlu0 %1154, %v522
    %v1156 = vpop.permute.xlu0 %1155
    %v1157 = vlaneseq
    %v1158 = vshrl.u32 %v1157, 7
    %v1159 = vadd.s32 %v1158, 56
    %1160 = vset.pattern.permute.xlu0 %v1159
    %1161 = vperm.xlu0 %1160, %v522
    %v1162 = vpop.permute.xlu0 %1161
    %v1163 = vlaneseq
    %v1164 = vshrl.u32 %v1163, 7
    %v1165 = vadd.s32 %v1164, 48
    %1166 = vset.pattern.permute.xlu0 %v1165
    %1167 = vperm.xlu0 %1166, %v535
    %v1168 = vpop.permute.xlu0 %1167
    %v1169 = vlaneseq
    %v1170 = vshrl.u32 %v1169, 7
    %v1171 = vadd.s32 %v1170, 56
    %1172 = vset.pattern.permute.xlu0 %v1171
    %1173 = vperm.xlu0 %1172, %v535
    %v1174 = vpop.permute.xlu0 %1173
    %v1175 = vlaneseq
    %v1176 = vshrl.u32 %v1175, 7
    %v1177 = vadd.s32 %v1176, 48
    %1178 = vset.pattern.permute.xlu0 %v1177
    %1179 = vperm.xlu0 %1178, %v548
    %v1180 = vpop.permute.xlu0 %1179
    %v1181 = vlaneseq
    %v1182 = vshrl.u32 %v1181, 7
    %v1183 = vadd.s32 %v1182, 56
    %1184 = vset.pattern.permute.xlu0 %v1183
    %1185 = vperm.xlu0 %1184, %v548
    %v1186 = vpop.permute.xlu0 %1185
    %v1187 = vlaneseq
    %v1188 = vshrl.u32 %v1187, 7
    %v1189 = vadd.s32 %v1188, 48
    %1190 = vset.pattern.permute.xlu0 %v1189
    %1191 = vperm.xlu0 %1190, %v561
    %v1192 = vpop.permute.xlu0 %1191
    %v1193 = vlaneseq
    %v1194 = vshrl.u32 %v1193, 7
    %v1195 = vadd.s32 %v1194, 56
    %1196 = vset.pattern.permute.xlu0 %v1195
    %1197 = vperm.xlu0 %1196, %v561
    %v1198 = vpop.permute.xlu0 %1197
    %v1199 = vlaneseq
    %v1200 = vshrl.u32 %v1199, 7
    %v1201 = vadd.s32 %v1200, 48
    %1202 = vset.pattern.permute.xlu0 %v1201
    %1203 = vperm.xlu0 %1202, %v574
    %v1204 = vpop.permute.xlu0 %1203
    %v1205 = vlaneseq
    %v1206 = vshrl.u32 %v1205, 7
    %v1207 = vadd.s32 %v1206, 56
    %1208 = vset.pattern.permute.xlu0 %v1207
    %1209 = vperm.xlu0 %1208, %v574
    %v1210 = vpop.permute.xlu0 %1209
    %v1211 = vmul.f32 %v1120, %v1099
    %v1212 = vmul.f32 %v1126, %v1100
    %v1213 = vmul.f32 %v1132, %v1101
    %v1214 = vmul.f32 %v1138, %v1102
    %v1215 = vmul.f32 %v1144, %v1103
    %v1216 = vmul.f32 %v1150, %v1104
    %v1217 = vmul.f32 %v1156, %v1105
    %v1218 = vmul.f32 %v1162, %v1106
    %v1219 = vmul.f32 %v1168, %v1107
    %v1220 = vmul.f32 %v1174, %v1108
    %v1221 = vmul.f32 %v1180, %v1109
    %v1222 = vmul.f32 %v1186, %v1110
    %v1223 = vmul.f32 %v1192, %v1111
    %v1224 = vmul.f32 %v1198, %v1112
    %v1225 = vmul.f32 %v1204, %v1113
    %v1226 = vmul.f32 %v1210, %v1114
    %v1227 = vadd.f32 %v1211, %v1212
    %v1228 = vrot.slane %v1227, 4
    %v1229 = vadd.f32 %v1227, %v1228
    %v1230 = vrot.slane %v1229, 2
    %v1231 = vadd.f32 %v1229, %v1230
    %v1232 = vrot.slane %v1231, 1
    %v1233 = vadd.f32 %v1231, %v1232
    %v1234 = vadd.f32 %v1213, %v1214
    %v1235 = vrot.slane %v1234, 4
    %v1236 = vadd.f32 %v1234, %v1235
    %v1237 = vrot.slane %v1236, 2
    %v1238 = vadd.f32 %v1236, %v1237
    %v1239 = vrot.slane %v1238, 1
    %v1240 = vadd.f32 %v1238, %v1239
    %v1241 = vadd.f32 %v1215, %v1216
    %v1242 = vrot.slane %v1241, 4
    %v1243 = vadd.f32 %v1241, %v1242
    %v1244 = vrot.slane %v1243, 2
    %v1245 = vadd.f32 %v1243, %v1244
    %v1246 = vrot.slane %v1245, 1
    %v1247 = vadd.f32 %v1245, %v1246
    %v1248 = vadd.f32 %v1217, %v1218
    %v1249 = vrot.slane %v1248, 4
    %v1250 = vadd.f32 %v1248, %v1249
    %v1251 = vrot.slane %v1250, 2
    %v1252 = vadd.f32 %v1250, %v1251
    %v1253 = vrot.slane %v1252, 1
    %v1254 = vadd.f32 %v1252, %v1253
    %v1255 = vadd.f32 %v1219, %v1220
    %v1256 = vrot.slane %v1255, 4
    %v1257 = vadd.f32 %v1255, %v1256
    %v1258 = vrot.slane %v1257, 2
    %v1259 = vadd.f32 %v1257, %v1258
    %v1260 = vrot.slane %v1259, 1
    %v1261 = vadd.f32 %v1259, %v1260
    %v1262 = vadd.f32 %v1221, %v1222
    %v1263 = vrot.slane %v1262, 4
    %v1264 = vadd.f32 %v1262, %v1263
    %v1265 = vrot.slane %v1264, 2
    %v1266 = vadd.f32 %v1264, %v1265
    %v1267 = vrot.slane %v1266, 1
    %v1268 = vadd.f32 %v1266, %v1267
    %v1269 = vadd.f32 %v1223, %v1224
    %v1270 = vrot.slane %v1269, 4
    %v1271 = vadd.f32 %v1269, %v1270
    %v1272 = vrot.slane %v1271, 2
    %v1273 = vadd.f32 %v1271, %v1272
    %v1274 = vrot.slane %v1273, 1
    %v1275 = vadd.f32 %v1273, %v1274
    %v1276 = vadd.f32 %v1225, %v1226
    %v1277 = vrot.slane %v1276, 4
    %v1278 = vadd.f32 %v1276, %v1277
    %v1279 = vrot.slane %v1278, 2
    %v1280 = vadd.f32 %v1278, %v1279
    %v1281 = vrot.slane %v1280, 1
    %v1282 = vadd.f32 %v1280, %v1281
    %v1283 = vadd.f32 %v1075, %v1233
    %v1284 = vadd.f32 %v1076, %v1240
    %v1285 = vadd.f32 %v1077, %v1247
    %v1286 = vadd.f32 %v1078, %v1254
    %v1287 = vadd.f32 %v1079, %v1261
    %v1288 = vadd.f32 %v1080, %v1268
    %v1289 = vadd.f32 %v1081, %v1275
    %v1290 = vadd.f32 %v1082, %v1282
    %v1291 = vld [vmem:[%s6 + $0x20] sm:$0xf]
    %v1292 = vld [vmem:[%s6 + $0x24] sm:$0xf]
    %v1293 = vld [vmem:[%s6 + $0x60] sm:$0xf]
    %v1294 = vld [vmem:[%s6 + $0x64] sm:$0xf]
    %v1295 = vld [vmem:[%s6 + $0xa0] sm:$0xf]
    %v1296 = vld [vmem:[%s6 + $0xa4] sm:$0xf]
    %v1297 = vld [vmem:[%s6 + $0xe0] sm:$0xf]
    %v1298 = vld [vmem:[%s6 + $0xe4] sm:$0xf]
    %v1299 = vld [vmem:[%s6 + $0x120] sm:$0xf]
    %v1300 = vld [vmem:[%s6 + $0x124] sm:$0xf]
    %v1301 = vld [vmem:[%s6 + $0x160] sm:$0xf]
    %v1302 = vld [vmem:[%s6 + $0x164] sm:$0xf]
    %v1303 = vld [vmem:[%s6 + $0x1a0] sm:$0xf]
    %v1304 = vld [vmem:[%s6 + $0x1a4] sm:$0xf]
    %v1305 = vld [vmem:[%s6 + $0x1e0] sm:$0xf]
    %v1306 = vld [vmem:[%s6 + $0x1e4] sm:$0xf]
    %v1307 = vunpack.c.l.bf16 %v1291
    %v1308 = vunpack.c.l.bf16 %v1292
    %v1309 = vunpack.c.l.bf16 %v1293
    %v1310 = vunpack.c.l.bf16 %v1294
    %v1311 = vunpack.c.l.bf16 %v1295
    %v1312 = vunpack.c.l.bf16 %v1296
    %v1313 = vunpack.c.l.bf16 %v1297
    %v1314 = vunpack.c.l.bf16 %v1298
    %v1315 = vunpack.c.l.bf16 %v1299
    %v1316 = vunpack.c.l.bf16 %v1300
    %v1317 = vunpack.c.l.bf16 %v1301
    %v1318 = vunpack.c.l.bf16 %v1302
    %v1319 = vunpack.c.l.bf16 %v1303
    %v1320 = vunpack.c.l.bf16 %v1304
    %v1321 = vunpack.c.l.bf16 %v1305
    %v1322 = vunpack.c.l.bf16 %v1306
    %v1323 = vlaneseq
    %v1324 = vshrl.u32 %v1323, 7
    %v1325 = vadd.s32 %v1324, 64
    %1326 = vset.pattern.permute.xlu0 %v1325
    %1327 = vperm.xlu0 %1326, %v483
    %v1328 = vpop.permute.xlu0 %1327
    %v1329 = vlaneseq
    %v1330 = vshrl.u32 %v1329, 7
    %v1331 = vadd.s32 %v1330, 72
    %1332 = vset.pattern.permute.xlu0 %v1331
    %1333 = vperm.xlu0 %1332, %v483
    %v1334 = vpop.permute.xlu0 %1333
    %v1335 = vlaneseq
    %v1336 = vshrl.u32 %v1335, 7
    %v1337 = vadd.s32 %v1336, 64
    %1338 = vset.pattern.permute.xlu0 %v1337
    %1339 = vperm.xlu0 %1338, %v496
    %v1340 = vpop.permute.xlu0 %1339
    %v1341 = vlaneseq
    %v1342 = vshrl.u32 %v1341, 7
    %v1343 = vadd.s32 %v1342, 72
    %1344 = vset.pattern.permute.xlu0 %v1343
    %1345 = vperm.xlu0 %1344, %v496
    %v1346 = vpop.permute.xlu0 %1345
    %v1347 = vlaneseq
    %v1348 = vshrl.u32 %v1347, 7
    %v1349 = vadd.s32 %v1348, 64
    %1350 = vset.pattern.permute.xlu0 %v1349
    %1351 = vperm.xlu0 %1350, %v509
    %v1352 = vpop.permute.xlu0 %1351
    %v1353 = vlaneseq
    %v1354 = vshrl.u32 %v1353, 7
    %v1355 = vadd.s32 %v1354, 72
    %1356 = vset.pattern.permute.xlu0 %v1355
    %1357 = vperm.xlu0 %1356, %v509
    %v1358 = vpop.permute.xlu0 %1357
    %v1359 = vlaneseq
    %v1360 = vshrl.u32 %v1359, 7
    %v1361 = vadd.s32 %v1360, 64
    %1362 = vset.pattern.permute.xlu0 %v1361
    %1363 = vperm.xlu0 %1362, %v522
    %v1364 = vpop.permute.xlu0 %1363
    %v1365 = vlaneseq
    %v1366 = vshrl.u32 %v1365, 7
    %v1367 = vadd.s32 %v1366, 72
    %1368 = vset.pattern.permute.xlu0 %v1367
    %1369 = vperm.xlu0 %1368, %v522
    %v1370 = vpop.permute.xlu0 %1369
    %v1371 = vlaneseq
    %v1372 = vshrl.u32 %v1371, 7
    %v1373 = vadd.s32 %v1372, 64
    %1374 = vset.pattern.permute.xlu0 %v1373
    %1375 = vperm.xlu0 %1374, %v535
    %v1376 = vpop.permute.xlu0 %1375
    %v1377 = vlaneseq
    %v1378 = vshrl.u32 %v1377, 7
    %v1379 = vadd.s32 %v1378, 72
    %1380 = vset.pattern.permute.xlu0 %v1379
    %1381 = vperm.xlu0 %1380, %v535
    %v1382 = vpop.permute.xlu0 %1381
    %v1383 = vlaneseq
    %v1384 = vshrl.u32 %v1383, 7
    %v1385 = vadd.s32 %v1384, 64
    %1386 = vset.pattern.permute.xlu0 %v1385
    %1387 = vperm.xlu0 %1386, %v548
    %v1388 = vpop.permute.xlu0 %1387
    %v1389 = vlaneseq
    %v1390 = vshrl.u32 %v1389, 7
    %v1391 = vadd.s32 %v1390, 72
    %1392 = vset.pattern.permute.xlu0 %v1391
    %1393 = vperm.xlu0 %1392, %v548
    %v1394 = vpop.permute.xlu0 %1393
    %v1395 = vlaneseq
    %v1396 = vshrl.u32 %v1395, 7
    %v1397 = vadd.s32 %v1396, 64
    %1398 = vset.pattern.permute.xlu0 %v1397
    %1399 = vperm.xlu0 %1398, %v561
    %v1400 = vpop.permute.xlu0 %1399
    %v1401 = vlaneseq
    %v1402 = vshrl.u32 %v1401, 7
    %v1403 = vadd.s32 %v1402, 72
    %1404 = vset.pattern.permute.xlu0 %v1403
    %1405 = vperm.xlu0 %1404, %v561
    %v1406 = vpop.permute.xlu0 %1405
    %v1407 = vlaneseq
    %v1408 = vshrl.u32 %v1407, 7
    %v1409 = vadd.s32 %v1408, 64
    %1410 = vset.pattern.permute.xlu0 %v1409
    %1411 = vperm.xlu0 %1410, %v574
    %v1412 = vpop.permute.xlu0 %1411
    %v1413 = vlaneseq
    %v1414 = vshrl.u32 %v1413, 7
    %v1415 = vadd.s32 %v1414, 72
    %1416 = vset.pattern.permute.xlu0 %v1415
    %1417 = vperm.xlu0 %1416, %v574
    %v1418 = vpop.permute.xlu0 %1417
    %v1419 = vmul.f32 %v1328, %v1307
    %v1420 = vmul.f32 %v1334, %v1308
    %v1421 = vmul.f32 %v1340, %v1309
    %v1422 = vmul.f32 %v1346, %v1310
    %v1423 = vmul.f32 %v1352, %v1311
    %v1424 = vmul.f32 %v1358, %v1312
    %v1425 = vmul.f32 %v1364, %v1313
    %v1426 = vmul.f32 %v1370, %v1314
    %v1427 = vmul.f32 %v1376, %v1315
    %v1428 = vmul.f32 %v1382, %v1316
    %v1429 = vmul.f32 %v1388, %v1317
    %v1430 = vmul.f32 %v1394, %v1318
    %v1431 = vmul.f32 %v1400, %v1319
    %v1432 = vmul.f32 %v1406, %v1320
    %v1433 = vmul.f32 %v1412, %v1321
    %v1434 = vmul.f32 %v1418, %v1322
    %v1435 = vadd.f32 %v1419, %v1420
    %v1436 = vrot.slane %v1435, 4
    %v1437 = vadd.f32 %v1435, %v1436
    %v1438 = vrot.slane %v1437, 2
    %v1439 = vadd.f32 %v1437, %v1438
    %v1440 = vrot.slane %v1439, 1
    %v1441 = vadd.f32 %v1439, %v1440
    %v1442 = vadd.f32 %v1421, %v1422
    %v1443 = vrot.slane %v1442, 4
    %v1444 = vadd.f32 %v1442, %v1443
    %v1445 = vrot.slane %v1444, 2
    %v1446 = vadd.f32 %v1444, %v1445
    %v1447 = vrot.slane %v1446, 1
    %v1448 = vadd.f32 %v1446, %v1447
    %v1449 = vadd.f32 %v1423, %v1424
    %v1450 = vrot.slane %v1449, 4
    %v1451 = vadd.f32 %v1449, %v1450
    %v1452 = vrot.slane %v1451, 2
    %v1453 = vadd.f32 %v1451, %v1452
    %v1454 = vrot.slane %v1453, 1
    %v1455 = vadd.f32 %v1453, %v1454
    %v1456 = vadd.f32 %v1425, %v1426
    %v1457 = vrot.slane %v1456, 4
    %v1458 = vadd.f32 %v1456, %v1457
    %v1459 = vrot.slane %v1458, 2
    %v1460 = vadd.f32 %v1458, %v1459
    %v1461 = vrot.slane %v1460, 1
    %v1462 = vadd.f32 %v1460, %v1461
    %v1463 = vadd.f32 %v1427, %v1428
    %v1464 = vrot.slane %v1463, 4
    %v1465 = vadd.f32 %v1463, %v1464
    %v1466 = vrot.slane %v1465, 2
    %v1467 = vadd.f32 %v1465, %v1466
    %v1468 = vrot.slane %v1467, 1
    %v1469 = vadd.f32 %v1467, %v1468
    %v1470 = vadd.f32 %v1429, %v1430
    %v1471 = vrot.slane %v1470, 4
    %v1472 = vadd.f32 %v1470, %v1471
    %v1473 = vrot.slane %v1472, 2
    %v1474 = vadd.f32 %v1472, %v1473
    %v1475 = vrot.slane %v1474, 1
    %v1476 = vadd.f32 %v1474, %v1475
    %v1477 = vadd.f32 %v1431, %v1432
    %v1478 = vrot.slane %v1477, 4
    %v1479 = vadd.f32 %v1477, %v1478
    %v1480 = vrot.slane %v1479, 2
    %v1481 = vadd.f32 %v1479, %v1480
    %v1482 = vrot.slane %v1481, 1
    %v1483 = vadd.f32 %v1481, %v1482
    %v1484 = vadd.f32 %v1433, %v1434
    %v1485 = vrot.slane %v1484, 4
    %v1486 = vadd.f32 %v1484, %v1485
    %v1487 = vrot.slane %v1486, 2
    %v1488 = vadd.f32 %v1486, %v1487
    %v1489 = vrot.slane %v1488, 1
    %v1490 = vadd.f32 %v1488, %v1489
    %v1491 = vadd.f32 %v1283, %v1441
    %v1492 = vadd.f32 %v1284, %v1448
    %v1493 = vadd.f32 %v1285, %v1455
    %v1494 = vadd.f32 %v1286, %v1462
    %v1495 = vadd.f32 %v1287, %v1469
    %v1496 = vadd.f32 %v1288, %v1476
    %v1497 = vadd.f32 %v1289, %v1483
    %v1498 = vadd.f32 %v1290, %v1490
    %v1499 = vld [vmem:[%s6 + $0x28] sm:$0xf]
    %v1500 = vld [vmem:[%s6 + $0x2c] sm:$0xf]
    %v1501 = vld [vmem:[%s6 + $0x68] sm:$0xf]
    %v1502 = vld [vmem:[%s6 + $0x6c] sm:$0xf]
    %v1503 = vld [vmem:[%s6 + $0xa8] sm:$0xf]
    %v1504 = vld [vmem:[%s6 + $0xac] sm:$0xf]
    %v1505 = vld [vmem:[%s6 + $0xe8] sm:$0xf]
    %v1506 = vld [vmem:[%s6 + $0xec] sm:$0xf]
    %v1507 = vld [vmem:[%s6 + $0x128] sm:$0xf]
    %v1508 = vld [vmem:[%s6 + $0x12c] sm:$0xf]
    %v1509 = vld [vmem:[%s6 + $0x168] sm:$0xf]
    %v1510 = vld [vmem:[%s6 + $0x16c] sm:$0xf]
    %v1511 = vld [vmem:[%s6 + $0x1a8] sm:$0xf]
    %v1512 = vld [vmem:[%s6 + $0x1ac] sm:$0xf]
    %v1513 = vld [vmem:[%s6 + $0x1e8] sm:$0xf]
    %v1514 = vld [vmem:[%s6 + $0x1ec] sm:$0xf]
    %v1515 = vunpack.c.l.bf16 %v1499
    %v1516 = vunpack.c.l.bf16 %v1500
    %v1517 = vunpack.c.l.bf16 %v1501
    %v1518 = vunpack.c.l.bf16 %v1502
    %v1519 = vunpack.c.l.bf16 %v1503
    %v1520 = vunpack.c.l.bf16 %v1504
    %v1521 = vunpack.c.l.bf16 %v1505
    %v1522 = vunpack.c.l.bf16 %v1506
    %v1523 = vunpack.c.l.bf16 %v1507
    %v1524 = vunpack.c.l.bf16 %v1508
    %v1525 = vunpack.c.l.bf16 %v1509
    %v1526 = vunpack.c.l.bf16 %v1510
    %v1527 = vunpack.c.l.bf16 %v1511
    %v1528 = vunpack.c.l.bf16 %v1512
    %v1529 = vunpack.c.l.bf16 %v1513
    %v1530 = vunpack.c.l.bf16 %v1514
    %v1531 = vlaneseq
    %v1532 = vshrl.u32 %v1531, 7
    %v1533 = vadd.s32 %v1532, 80
    %1534 = vset.pattern.permute.xlu0 %v1533
    %1535 = vperm.xlu0 %1534, %v483
    %v1536 = vpop.permute.xlu0 %1535
    %v1537 = vlaneseq
    %v1538 = vshrl.u32 %v1537, 7
    %v1539 = vadd.s32 %v1538, 88
    %1540 = vset.pattern.permute.xlu0 %v1539
    %1541 = vperm.xlu0 %1540, %v483
    %v1542 = vpop.permute.xlu0 %1541
    %v1543 = vlaneseq
    %v1544 = vshrl.u32 %v1543, 7
    %v1545 = vadd.s32 %v1544, 80
    %1546 = vset.pattern.permute.xlu0 %v1545
    %1547 = vperm.xlu0 %1546, %v496
    %v1548 = vpop.permute.xlu0 %1547
    %v1549 = vlaneseq
    %v1550 = vshrl.u32 %v1549, 7
    %v1551 = vadd.s32 %v1550, 88
    %1552 = vset.pattern.permute.xlu0 %v1551
    %1553 = vperm.xlu0 %1552, %v496
    %v1554 = vpop.permute.xlu0 %1553
    %v1555 = vlaneseq
    %v1556 = vshrl.u32 %v1555, 7
    %v1557 = vadd.s32 %v1556, 80
    %1558 = vset.pattern.permute.xlu0 %v1557
    %1559 = vperm.xlu0 %1558, %v509
    %v1560 = vpop.permute.xlu0 %1559
    %v1561 = vlaneseq
    %v1562 = vshrl.u32 %v1561, 7
    %v1563 = vadd.s32 %v1562, 88
    %1564 = vset.pattern.permute.xlu0 %v1563
    %1565 = vperm.xlu0 %1564, %v509
    %v1566 = vpop.permute.xlu0 %1565
    %v1567 = vlaneseq
    %v1568 = vshrl.u32 %v1567, 7
    %v1569 = vadd.s32 %v1568, 80
    %1570 = vset.pattern.permute.xlu0 %v1569
    %1571 = vperm.xlu0 %1570, %v522
    %v1572 = vpop.permute.xlu0 %1571
    %v1573 = vlaneseq
    %v1574 = vshrl.u32 %v1573, 7
    %v1575 = vadd.s32 %v1574, 88
    %1576 = vset.pattern.permute.xlu0 %v1575
    %1577 = vperm.xlu0 %1576, %v522
    %v1578 = vpop.permute.xlu0 %1577
    %v1579 = vlaneseq
    %v1580 = vshrl.u32 %v1579, 7
    %v1581 = vadd.s32 %v1580, 80
    %1582 = vset.pattern.permute.xlu0 %v1581
    %1583 = vperm.xlu0 %1582, %v535
    %v1584 = vpop.permute.xlu0 %1583
    %v1585 = vlaneseq
    %v1586 = vshrl.u32 %v1585, 7
    %v1587 = vadd.s32 %v1586, 88
    %1588 = vset.pattern.permute.xlu0 %v1587
    %1589 = vperm.xlu0 %1588, %v535
    %v1590 = vpop.permute.xlu0 %1589
    %v1591 = vlaneseq
    %v1592 = vshrl.u32 %v1591, 7
    %v1593 = vadd.s32 %v1592, 80
    %1594 = vset.pattern.permute.xlu0 %v1593
    %1595 = vperm.xlu0 %1594, %v548
    %v1596 = vpop.permute.xlu0 %1595
    %v1597 = vlaneseq
    %v1598 = vshrl.u32 %v1597, 7
    %v1599 = vadd.s32 %v1598, 88
    %1600 = vset.pattern.permute.xlu0 %v1599
    %1601 = vperm.xlu0 %1600, %v548
    %v1602 = vpop.permute.xlu0 %1601
    %v1603 = vlaneseq
    %v1604 = vshrl.u32 %v1603, 7
    %v1605 = vadd.s32 %v1604, 80
    %1606 = vset.pattern.permute.xlu0 %v1605
    %1607 = vperm.xlu0 %1606, %v561
    %v1608 = vpop.permute.xlu0 %1607
    %v1609 = vlaneseq
    %v1610 = vshrl.u32 %v1609, 7
    %v1611 = vadd.s32 %v1610, 88
    %1612 = vset.pattern.permute.xlu0 %v1611
    %1613 = vperm.xlu0 %1612, %v561
    %v1614 = vpop.permute.xlu0 %1613
    %v1615 = vlaneseq
    %v1616 = vshrl.u32 %v1615, 7
    %v1617 = vadd.s32 %v1616, 80
    %1618 = vset.pattern.permute.xlu0 %v1617
    %1619 = vperm.xlu0 %1618, %v574
    %v1620 = vpop.permute.xlu0 %1619
    %v1621 = vlaneseq
    %v1622 = vshrl.u32 %v1621, 7
    %v1623 = vadd.s32 %v1622, 88
    %1624 = vset.pattern.permute.xlu0 %v1623
    %1625 = vperm.xlu0 %1624, %v574
    %v1626 = vpop.permute.xlu0 %1625
    %v1627 = vmul.f32 %v1536, %v1515
    %v1628 = vmul.f32 %v1542, %v1516
    %v1629 = vmul.f32 %v1548, %v1517
    %v1630 = vmul.f32 %v1554, %v1518
    %v1631 = vmul.f32 %v1560, %v1519
    %v1632 = vmul.f32 %v1566, %v1520
    %v1633 = vmul.f32 %v1572, %v1521
    %v1634 = vmul.f32 %v1578, %v1522
    %v1635 = vmul.f32 %v1584, %v1523
    %v1636 = vmul.f32 %v1590, %v1524
    %v1637 = vmul.f32 %v1596, %v1525
    %v1638 = vmul.f32 %v1602, %v1526
    %v1639 = vmul.f32 %v1608, %v1527
    %v1640 = vmul.f32 %v1614, %v1528
    %v1641 = vmul.f32 %v1620, %v1529
    %v1642 = vmul.f32 %v1626, %v1530
    %v1643 = vadd.f32 %v1627, %v1628
    %v1644 = vrot.slane %v1643, 4
    %v1645 = vadd.f32 %v1643, %v1644
    %v1646 = vrot.slane %v1645, 2
    %v1647 = vadd.f32 %v1645, %v1646
    %v1648 = vrot.slane %v1647, 1
    %v1649 = vadd.f32 %v1647, %v1648
    %v1650 = vadd.f32 %v1629, %v1630
    %v1651 = vrot.slane %v1650, 4
    %v1652 = vadd.f32 %v1650, %v1651
    %v1653 = vrot.slane %v1652, 2
    %v1654 = vadd.f32 %v1652, %v1653
    %v1655 = vrot.slane %v1654, 1
    %v1656 = vadd.f32 %v1654, %v1655
    %v1657 = vadd.f32 %v1631, %v1632
    %v1658 = vrot.slane %v1657, 4
    %v1659 = vadd.f32 %v1657, %v1658
    %v1660 = vrot.slane %v1659, 2
    %v1661 = vadd.f32 %v1659, %v1660
    %v1662 = vrot.slane %v1661, 1
    %v1663 = vadd.f32 %v1661, %v1662
    %v1664 = vadd.f32 %v1633, %v1634
    %v1665 = vrot.slane %v1664, 4
    %v1666 = vadd.f32 %v1664, %v1665
    %v1667 = vrot.slane %v1666, 2
    %v1668 = vadd.f32 %v1666, %v1667
    %v1669 = vrot.slane %v1668, 1
    %v1670 = vadd.f32 %v1668, %v1669
    %v1671 = vadd.f32 %v1635, %v1636
    %v1672 = vrot.slane %v1671, 4
    %v1673 = vadd.f32 %v1671, %v1672
    %v1674 = vrot.slane %v1673, 2
    %v1675 = vadd.f32 %v1673, %v1674
    %v1676 = vrot.slane %v1675, 1
    %v1677 = vadd.f32 %v1675, %v1676
    %v1678 = vadd.f32 %v1637, %v1638
    %v1679 = vrot.slane %v1678, 4
    %v1680 = vadd.f32 %v1678, %v1679
    %v1681 = vrot.slane %v1680, 2
    %v1682 = vadd.f32 %v1680, %v1681
    %v1683 = vrot.slane %v1682, 1
    %v1684 = vadd.f32 %v1682, %v1683
    %v1685 = vadd.f32 %v1639, %v1640
    %v1686 = vrot.slane %v1685, 4
    %v1687 = vadd.f32 %v1685, %v1686
    %v1688 = vrot.slane %v1687, 2
    %v1689 = vadd.f32 %v1687, %v1688
    %v1690 = vrot.slane %v1689, 1
    %v1691 = vadd.f32 %v1689, %v1690
    %v1692 = vadd.f32 %v1641, %v1642
    %v1693 = vrot.slane %v1692, 4
    %v1694 = vadd.f32 %v1692, %v1693
    %v1695 = vrot.slane %v1694, 2
    %v1696 = vadd.f32 %v1694, %v1695
    %v1697 = vrot.slane %v1696, 1
    %v1698 = vadd.f32 %v1696, %v1697
    %v1699 = vadd.f32 %v1491, %v1649
    %v1700 = vadd.f32 %v1492, %v1656
    %v1701 = vadd.f32 %v1493, %v1663
    %v1702 = vadd.f32 %v1494, %v1670
    %v1703 = vadd.f32 %v1495, %v1677
    %v1704 = vadd.f32 %v1496, %v1684
    %v1705 = vadd.f32 %v1497, %v1691
    %v1706 = vadd.f32 %v1498, %v1698
    %v1707 = vld [vmem:[%s6 + $0x30] sm:$0xf]
    %v1708 = vld [vmem:[%s6 + $0x34] sm:$0xf]
    %v1709 = vld [vmem:[%s6 + $0x70] sm:$0xf]
    %v1710 = vld [vmem:[%s6 + $0x74] sm:$0xf]
    %v1711 = vld [vmem:[%s6 + $0xb0] sm:$0xf]
    %v1712 = vld [vmem:[%s6 + $0xb4] sm:$0xf]
    %v1713 = vld [vmem:[%s6 + $0xf0] sm:$0xf]
    %v1714 = vld [vmem:[%s6 + $0xf4] sm:$0xf]
    %v1715 = vld [vmem:[%s6 + $0x130] sm:$0xf]
    %v1716 = vld [vmem:[%s6 + $0x134] sm:$0xf]
    %v1717 = vld [vmem:[%s6 + $0x170] sm:$0xf]
    %v1718 = vld [vmem:[%s6 + $0x174] sm:$0xf]
    %v1719 = vld [vmem:[%s6 + $0x1b0] sm:$0xf]
    %v1720 = vld [vmem:[%s6 + $0x1b4] sm:$0xf]
    %v1721 = vld [vmem:[%s6 + $0x1f0] sm:$0xf]
    %v1722 = vld [vmem:[%s6 + $0x1f4] sm:$0xf]
    %v1723 = vunpack.c.l.bf16 %v1707
    %v1724 = vunpack.c.l.bf16 %v1708
    %v1725 = vunpack.c.l.bf16 %v1709
    %v1726 = vunpack.c.l.bf16 %v1710
    %v1727 = vunpack.c.l.bf16 %v1711
    %v1728 = vunpack.c.l.bf16 %v1712
    %v1729 = vunpack.c.l.bf16 %v1713
    %v1730 = vunpack.c.l.bf16 %v1714
    %v1731 = vunpack.c.l.bf16 %v1715
    %v1732 = vunpack.c.l.bf16 %v1716
    %v1733 = vunpack.c.l.bf16 %v1717
    %v1734 = vunpack.c.l.bf16 %v1718
    %v1735 = vunpack.c.l.bf16 %v1719
    %v1736 = vunpack.c.l.bf16 %v1720
    %v1737 = vunpack.c.l.bf16 %v1721
    %v1738 = vunpack.c.l.bf16 %v1722
    %v1739 = vlaneseq
    %v1740 = vshrl.u32 %v1739, 7
    %v1741 = vadd.s32 %v1740, 96
    %1742 = vset.pattern.permute.xlu0 %v1741
    %1743 = vperm.xlu0 %1742, %v483
    %v1744 = vpop.permute.xlu0 %1743
    %v1745 = vlaneseq
    %v1746 = vshrl.u32 %v1745, 7
    %v1747 = vadd.s32 %v1746, 104
    %1748 = vset.pattern.permute.xlu0 %v1747
    %1749 = vperm.xlu0 %1748, %v483
    %v1750 = vpop.permute.xlu0 %1749
    %v1751 = vlaneseq
    %v1752 = vshrl.u32 %v1751, 7
    %v1753 = vadd.s32 %v1752, 96
    %1754 = vset.pattern.permute.xlu0 %v1753
    %1755 = vperm.xlu0 %1754, %v496
    %v1756 = vpop.permute.xlu0 %1755
    %v1757 = vlaneseq
    %v1758 = vshrl.u32 %v1757, 7
    %v1759 = vadd.s32 %v1758, 104
    %1760 = vset.pattern.permute.xlu0 %v1759
    %1761 = vperm.xlu0 %1760, %v496
    %v1762 = vpop.permute.xlu0 %1761
    %v1763 = vlaneseq
    %v1764 = vshrl.u32 %v1763, 7
    %v1765 = vadd.s32 %v1764, 96
    %1766 = vset.pattern.permute.xlu0 %v1765
    %1767 = vperm.xlu0 %1766, %v509
    %v1768 = vpop.permute.xlu0 %1767
    %v1769 = vlaneseq
    %v1770 = vshrl.u32 %v1769, 7
    %v1771 = vadd.s32 %v1770, 104
    %1772 = vset.pattern.permute.xlu0 %v1771
    %1773 = vperm.xlu0 %1772, %v509
    %v1774 = vpop.permute.xlu0 %1773
    %v1775 = vlaneseq
    %v1776 = vshrl.u32 %v1775, 7
    %v1777 = vadd.s32 %v1776, 96
    %1778 = vset.pattern.permute.xlu0 %v1777
    %1779 = vperm.xlu0 %1778, %v522
    %v1780 = vpop.permute.xlu0 %1779
    %v1781 = vlaneseq
    %v1782 = vshrl.u32 %v1781, 7
    %v1783 = vadd.s32 %v1782, 104
    %1784 = vset.pattern.permute.xlu0 %v1783
    %1785 = vperm.xlu0 %1784, %v522
    %v1786 = vpop.permute.xlu0 %1785
    %v1787 = vlaneseq
    %v1788 = vshrl.u32 %v1787, 7
    %v1789 = vadd.s32 %v1788, 96
    %1790 = vset.pattern.permute.xlu0 %v1789
    %1791 = vperm.xlu0 %1790, %v535
    %v1792 = vpop.permute.xlu0 %1791
    %v1793 = vlaneseq
    %v1794 = vshrl.u32 %v1793, 7
    %v1795 = vadd.s32 %v1794, 104
    %1796 = vset.pattern.permute.xlu0 %v1795
    %1797 = vperm.xlu0 %1796, %v535
    %v1798 = vpop.permute.xlu0 %1797
    %v1799 = vlaneseq
    %v1800 = vshrl.u32 %v1799, 7
    %v1801 = vadd.s32 %v1800, 96
    %1802 = vset.pattern.permute.xlu0 %v1801
    %1803 = vperm.xlu0 %1802, %v548
    %v1804 = vpop.permute.xlu0 %1803
    %v1805 = vlaneseq
    %v1806 = vshrl.u32 %v1805, 7
    %v1807 = vadd.s32 %v1806, 104
    %1808 = vset.pattern.permute.xlu0 %v1807
    %1809 = vperm.xlu0 %1808, %v548
    %v1810 = vpop.permute.xlu0 %1809
    %v1811 = vlaneseq
    %v1812 = vshrl.u32 %v1811, 7
    %v1813 = vadd.s32 %v1812, 96
    %1814 = vset.pattern.permute.xlu0 %v1813
    %1815 = vperm.xlu0 %1814, %v561
    %v1816 = vpop.permute.xlu0 %1815
    %v1817 = vlaneseq
    %v1818 = vshrl.u32 %v1817, 7
    %v1819 = vadd.s32 %v1818, 104
    %1820 = vset.pattern.permute.xlu0 %v1819
    %1821 = vperm.xlu0 %1820, %v561
    %v1822 = vpop.permute.xlu0 %1821
    %v1823 = vlaneseq
    %v1824 = vshrl.u32 %v1823, 7
    %v1825 = vadd.s32 %v1824, 96
    %1826 = vset.pattern.permute.xlu0 %v1825
    %1827 = vperm.xlu0 %1826, %v574
    %v1828 = vpop.permute.xlu0 %1827
    %v1829 = vlaneseq
    %v1830 = vshrl.u32 %v1829, 7
    %v1831 = vadd.s32 %v1830, 104
    %1832 = vset.pattern.permute.xlu0 %v1831
    %1833 = vperm.xlu0 %1832, %v574
    %v1834 = vpop.permute.xlu0 %1833
    %v1835 = vmul.f32 %v1744, %v1723
    %v1836 = vmul.f32 %v1750, %v1724
    %v1837 = vmul.f32 %v1756, %v1725
    %v1838 = vmul.f32 %v1762, %v1726
    %v1839 = vmul.f32 %v1768, %v1727
    %v1840 = vmul.f32 %v1774, %v1728
    %v1841 = vmul.f32 %v1780, %v1729
    %v1842 = vmul.f32 %v1786, %v1730
    %v1843 = vmul.f32 %v1792, %v1731
    %v1844 = vmul.f32 %v1798, %v1732
    %v1845 = vmul.f32 %v1804, %v1733
    %v1846 = vmul.f32 %v1810, %v1734
    %v1847 = vmul.f32 %v1816, %v1735
    %v1848 = vmul.f32 %v1822, %v1736
    %v1849 = vmul.f32 %v1828, %v1737
    %v1850 = vmul.f32 %v1834, %v1738
    %v1851 = vadd.f32 %v1835, %v1836
    %v1852 = vrot.slane %v1851, 4
    %v1853 = vadd.f32 %v1851, %v1852
    %v1854 = vrot.slane %v1853, 2
    %v1855 = vadd.f32 %v1853, %v1854
    %v1856 = vrot.slane %v1855, 1
    %v1857 = vadd.f32 %v1855, %v1856
    %v1858 = vadd.f32 %v1837, %v1838
    %v1859 = vrot.slane %v1858, 4
    %v1860 = vadd.f32 %v1858, %v1859
    %v1861 = vrot.slane %v1860, 2
    %v1862 = vadd.f32 %v1860, %v1861
    %v1863 = vrot.slane %v1862, 1
    %v1864 = vadd.f32 %v1862, %v1863
    %v1865 = vadd.f32 %v1839, %v1840
    %v1866 = vrot.slane %v1865, 4
    %v1867 = vadd.f32 %v1865, %v1866
    %v1868 = vrot.slane %v1867, 2
    %v1869 = vadd.f32 %v1867, %v1868
    %v1870 = vrot.slane %v1869, 1
    %v1871 = vadd.f32 %v1869, %v1870
    %v1872 = vadd.f32 %v1841, %v1842
    %v1873 = vrot.slane %v1872, 4
    %v1874 = vadd.f32 %v1872, %v1873
    %v1875 = vrot.slane %v1874, 2
    %v1876 = vadd.f32 %v1874, %v1875
    %v1877 = vrot.slane %v1876, 1
    %v1878 = vadd.f32 %v1876, %v1877
    %v1879 = vadd.f32 %v1843, %v1844
    %v1880 = vrot.slane %v1879, 4
    %v1881 = vadd.f32 %v1879, %v1880
    %v1882 = vrot.slane %v1881, 2
    %v1883 = vadd.f32 %v1881, %v1882
    %v1884 = vrot.slane %v1883, 1
    %v1885 = vadd.f32 %v1883, %v1884
    %v1886 = vadd.f32 %v1845, %v1846
    %v1887 = vrot.slane %v1886, 4
    %v1888 = vadd.f32 %v1886, %v1887
    %v1889 = vrot.slane %v1888, 2
    %v1890 = vadd.f32 %v1888, %v1889
    %v1891 = vrot.slane %v1890, 1
    %v1892 = vadd.f32 %v1890, %v1891
    %v1893 = vadd.f32 %v1847, %v1848
    %v1894 = vrot.slane %v1893, 4
    %v1895 = vadd.f32 %v1893, %v1894
    %v1896 = vrot.slane %v1895, 2
    %v1897 = vadd.f32 %v1895, %v1896
    %v1898 = vrot.slane %v1897, 1
    %v1899 = vadd.f32 %v1897, %v1898
    %v1900 = vadd.f32 %v1849, %v1850
    %v1901 = vrot.slane %v1900, 4
    %v1902 = vadd.f32 %v1900, %v1901
    %v1903 = vrot.slane %v1902, 2
    %v1904 = vadd.f32 %v1902, %v1903
    %v1905 = vrot.slane %v1904, 1
    %v1906 = vadd.f32 %v1904, %v1905
    %v1907 = vadd.f32 %v1699, %v1857
    %v1908 = vadd.f32 %v1700, %v1864
    %v1909 = vadd.f32 %v1701, %v1871
    %v1910 = vadd.f32 %v1702, %v1878
    %v1911 = vadd.f32 %v1703, %v1885
    %v1912 = vadd.f32 %v1704, %v1892
    %v1913 = vadd.f32 %v1705, %v1899
    %v1914 = vadd.f32 %v1706, %v1906
    %v1915 = vld [vmem:[%s6 + $0x38] sm:$0xf]
    %v1916 = vld [vmem:[%s6 + $0x3c] sm:$0xf]
    %v1917 = vld [vmem:[%s6 + $0x78] sm:$0xf]
    %v1918 = vld [vmem:[%s6 + $0x7c] sm:$0xf]
    %v1919 = vld [vmem:[%s6 + $0xb8] sm:$0xf]
    %v1920 = vld [vmem:[%s6 + $0xbc] sm:$0xf]
    %v1921 = vld [vmem:[%s6 + $0xf8] sm:$0xf]
    %v1922 = vld [vmem:[%s6 + $0xfc] sm:$0xf]
    %v1923 = vld [vmem:[%s6 + $0x138] sm:$0xf]
    %v1924 = vld [vmem:[%s6 + $0x13c] sm:$0xf]
    %v1925 = vld [vmem:[%s6 + $0x178] sm:$0xf]
    %v1926 = vld [vmem:[%s6 + $0x17c] sm:$0xf]
    %v1927 = vld [vmem:[%s6 + $0x1b8] sm:$0xf]
    %v1928 = vld [vmem:[%s6 + $0x1bc] sm:$0xf]
    %v1929 = vld [vmem:[%s6 + $0x1f8] sm:$0xf]
    %v1930 = vld [vmem:[%s6 + $0x1fc] sm:$0xf]
    %v1931 = vunpack.c.l.bf16 %v1915
    %v1932 = vunpack.c.l.bf16 %v1916
    %v1933 = vunpack.c.l.bf16 %v1917
    %v1934 = vunpack.c.l.bf16 %v1918
    %v1935 = vunpack.c.l.bf16 %v1919
    %v1936 = vunpack.c.l.bf16 %v1920
    %v1937 = vunpack.c.l.bf16 %v1921
    %v1938 = vunpack.c.l.bf16 %v1922
    %v1939 = vunpack.c.l.bf16 %v1923
    %v1940 = vunpack.c.l.bf16 %v1924
    %v1941 = vunpack.c.l.bf16 %v1925
    %v1942 = vunpack.c.l.bf16 %v1926
    %v1943 = vunpack.c.l.bf16 %v1927
    %v1944 = vunpack.c.l.bf16 %v1928
    %v1945 = vunpack.c.l.bf16 %v1929
    %v1946 = vunpack.c.l.bf16 %v1930
    %v1947 = vlaneseq
    %v1948 = vshrl.u32 %v1947, 7
    %v1949 = vadd.s32 %v1948, 112
    %1950 = vset.pattern.permute.xlu0 %v1949
    %1951 = vperm.xlu0 %1950, %v483
    %v1952 = vpop.permute.xlu0 %1951
    %v1953 = vlaneseq
    %v1954 = vshrl.u32 %v1953, 7
    %v1955 = vadd.s32 %v1954, 120
    %1956 = vset.pattern.permute.xlu0 %v1955
    %1957 = vperm.xlu0 %1956, %v483
    %v1958 = vpop.permute.xlu0 %1957
    %v1959 = vlaneseq
    %v1960 = vshrl.u32 %v1959, 7
    %v1961 = vadd.s32 %v1960, 112
    %1962 = vset.pattern.permute.xlu0 %v1961
    %1963 = vperm.xlu0 %1962, %v496
    %v1964 = vpop.permute.xlu0 %1963
    %v1965 = vlaneseq
    %v1966 = vshrl.u32 %v1965, 7
    %v1967 = vadd.s32 %v1966, 120
    %1968 = vset.pattern.permute.xlu0 %v1967
    %1969 = vperm.xlu0 %1968, %v496
    %v1970 = vpop.permute.xlu0 %1969
    %v1971 = vlaneseq
    %v1972 = vshrl.u32 %v1971, 7
    %v1973 = vadd.s32 %v1972, 112
    %1974 = vset.pattern.permute.xlu0 %v1973
    %1975 = vperm.xlu0 %1974, %v509
    %v1976 = vpop.permute.xlu0 %1975
    %v1977 = vlaneseq
    %v1978 = vshrl.u32 %v1977, 7
    %v1979 = vadd.s32 %v1978, 120
    %1980 = vset.pattern.permute.xlu0 %v1979
    %1981 = vperm.xlu0 %1980, %v509
    %v1982 = vpop.permute.xlu0 %1981
    %v1983 = vlaneseq
    %v1984 = vshrl.u32 %v1983, 7
    %v1985 = vadd.s32 %v1984, 112
    %1986 = vset.pattern.permute.xlu0 %v1985
    %1987 = vperm.xlu0 %1986, %v522
    %v1988 = vpop.permute.xlu0 %1987
    %v1989 = vlaneseq
    %v1990 = vshrl.u32 %v1989, 7
    %v1991 = vadd.s32 %v1990, 120
    %1992 = vset.pattern.permute.xlu0 %v1991
    %1993 = vperm.xlu0 %1992, %v522
    %v1994 = vpop.permute.xlu0 %1993
    %v1995 = vlaneseq
    %v1996 = vshrl.u32 %v1995, 7
    %v1997 = vadd.s32 %v1996, 112
    %1998 = vset.pattern.permute.xlu0 %v1997
    %1999 = vperm.xlu0 %1998, %v535
    %v2000 = vpop.permute.xlu0 %1999
    %v2001 = vlaneseq
    %v2002 = vshrl.u32 %v2001, 7
    %v2003 = vadd.s32 %v2002, 120
    %2004 = vset.pattern.permute.xlu0 %v2003
    %2005 = vperm.xlu0 %2004, %v535
    %v2006 = vpop.permute.xlu0 %2005
    %v2007 = vlaneseq
    %v2008 = vshrl.u32 %v2007, 7
    %v2009 = vadd.s32 %v2008, 112
    %2010 = vset.pattern.permute.xlu0 %v2009
    %2011 = vperm.xlu0 %2010, %v548
    %v2012 = vpop.permute.xlu0 %2011
    %v2013 = vlaneseq
    %v2014 = vshrl.u32 %v2013, 7
    %v2015 = vadd.s32 %v2014, 120
    %2016 = vset.pattern.permute.xlu0 %v2015
    %2017 = vperm.xlu0 %2016, %v548
    %v2018 = vpop.permute.xlu0 %2017
    %v2019 = vlaneseq
    %v2020 = vshrl.u32 %v2019, 7
    %v2021 = vadd.s32 %v2020, 112
    %2022 = vset.pattern.permute.xlu0 %v2021
    %2023 = vperm.xlu0 %2022, %v561
    %v2024 = vpop.permute.xlu0 %2023
    %v2025 = vlaneseq
    %v2026 = vshrl.u32 %v2025, 7
    %v2027 = vadd.s32 %v2026, 120
    %2028 = vset.pattern.permute.xlu0 %v2027
    %2029 = vperm.xlu0 %2028, %v561
    %v2030 = vpop.permute.xlu0 %2029
    %v2031 = vlaneseq
    %v2032 = vshrl.u32 %v2031, 7
    %v2033 = vadd.s32 %v2032, 112
    %2034 = vset.pattern.permute.xlu0 %v2033
    %2035 = vperm.xlu0 %2034, %v574
    %v2036 = vpop.permute.xlu0 %2035
    %v2037 = vlaneseq
    %v2038 = vshrl.u32 %v2037, 7
    %v2039 = vadd.s32 %v2038, 120
    %2040 = vset.pattern.permute.xlu0 %v2039
    %2041 = vperm.xlu0 %2040, %v574
    %v2042 = vpop.permute.xlu0 %2041
    %v2043 = vmul.f32 %v1952, %v1931
    %v2044 = vmul.f32 %v1958, %v1932
    %v2045 = vmul.f32 %v1964, %v1933
    %v2046 = vmul.f32 %v1970, %v1934
    %v2047 = vmul.f32 %v1976, %v1935
    %v2048 = vmul.f32 %v1982, %v1936
    %v2049 = vmul.f32 %v1988, %v1937
    %v2050 = vmul.f32 %v1994, %v1938
    %v2051 = vmul.f32 %v2000, %v1939
    %v2052 = vmul.f32 %v2006, %v1940
    %v2053 = vmul.f32 %v2012, %v1941
    %v2054 = vmul.f32 %v2018, %v1942
    %v2055 = vmul.f32 %v2024, %v1943
    %v2056 = vmul.f32 %v2030, %v1944
    %v2057 = vmul.f32 %v2036, %v1945
    %v2058 = vmul.f32 %v2042, %v1946
    %v2059 = vadd.f32 %v2043, %v2044
    %v2060 = vrot.slane %v2059, 4
    %v2061 = vadd.f32 %v2059, %v2060
    %v2062 = vrot.slane %v2061, 2
    %v2063 = vadd.f32 %v2061, %v2062
    %v2064 = vrot.slane %v2063, 1
    %v2065 = vadd.f32 %v2063, %v2064
    %v2066 = vadd.f32 %v2045, %v2046
    %v2067 = vrot.slane %v2066, 4
    %v2068 = vadd.f32 %v2066, %v2067
    %v2069 = vrot.slane %v2068, 2
    %v2070 = vadd.f32 %v2068, %v2069
    %v2071 = vrot.slane %v2070, 1
    %v2072 = vadd.f32 %v2070, %v2071
    %v2073 = vadd.f32 %v2047, %v2048
    %v2074 = vrot.slane %v2073, 4
    %v2075 = vadd.f32 %v2073, %v2074
    %v2076 = vrot.slane %v2075, 2
    %v2077 = vadd.f32 %v2075, %v2076
    %v2078 = vrot.slane %v2077, 1
    %v2079 = vadd.f32 %v2077, %v2078
    %v2080 = vadd.f32 %v2049, %v2050
    %v2081 = vrot.slane %v2080, 4
    %v2082 = vadd.f32 %v2080, %v2081
    %v2083 = vrot.slane %v2082, 2
    %v2084 = vadd.f32 %v2082, %v2083
    %v2085 = vrot.slane %v2084, 1
    %v2086 = vadd.f32 %v2084, %v2085
    %v2087 = vadd.f32 %v2051, %v2052
    %v2088 = vrot.slane %v2087, 4
    %v2089 = vadd.f32 %v2087, %v2088
    %v2090 = vrot.slane %v2089, 2
    %v2091 = vadd.f32 %v2089, %v2090
    %v2092 = vrot.slane %v2091, 1
    %v2093 = vadd.f32 %v2091, %v2092
    %v2094 = vadd.f32 %v2053, %v2054
    %v2095 = vrot.slane %v2094, 4
    %v2096 = vadd.f32 %v2094, %v2095
    %v2097 = vrot.slane %v2096, 2
    %v2098 = vadd.f32 %v2096, %v2097
    %v2099 = vrot.slane %v2098, 1
    %v2100 = vadd.f32 %v2098, %v2099
    %v2101 = vadd.f32 %v2055, %v2056
    %v2102 = vrot.slane %v2101, 4
    %v2103 = vadd.f32 %v2101, %v2102
    %v2104 = vrot.slane %v2103, 2
    %v2105 = vadd.f32 %v2103, %v2104
    %v2106 = vrot.slane %v2105, 1
    %v2107 = vadd.f32 %v2105, %v2106
    %v2108 = vadd.f32 %v2057, %v2058
    %v2109 = vrot.slane %v2108, 4
    %v2110 = vadd.f32 %v2108, %v2109
    %v2111 = vrot.slane %v2110, 2
    %v2112 = vadd.f32 %v2110, %v2111
    %v2113 = vrot.slane %v2112, 1
    %v2114 = vadd.f32 %v2112, %v2113
    %v2115 = vadd.f32 %v1907, %v2065
    %v2116 = vadd.f32 %v1908, %v2072
    %v2117 = vadd.f32 %v1909, %v2079
    %v2118 = vadd.f32 %v1910, %v2086
    %v2119 = vadd.f32 %v1911, %v2093
    %v2120 = vadd.f32 %v1912, %v2100
    %v2121 = vadd.f32 %v1913, %v2107
    %v2122 = vadd.f32 %v1914, %v2114
    %vm2131 = vcmask 1041409
    %v2132 = vsel %vm2131, %v2116, %v2115
    %vm2133 = vcmask 1042434
    %v2134 = vsel %vm2133, %v2117, %v2132
    %vm2135 = vcmask 1043459
    %v2136 = vsel %vm2135, %v2118, %v2134
    %vm2137 = vcmask 1044484
    %v2138 = vsel %vm2137, %v2119, %v2136
    %vm2139 = vcmask 1045509
    %v2140 = vsel %vm2139, %v2120, %v2138
    %vm2141 = vcmask 1046534
    %v2142 = vsel %vm2141, %v2121, %v2140
    %vm2143 = vcmask 1047559
    %v2144 = vsel %vm2143, %v2122, %v2142
    %v2146 = vadd.f32 %v450, %v2144
    %v2147 = vpack.c.bf16 %v2146, %v2146
    %2148 = vst [vmem:[#allocation3] sm:$0xf] %v2147
  $region41: #{wwm_forward.1} parent=0 // pred_fallthru
    _
  %v2149 = vld [vmem:[#allocation3] sm:$0xf]
  %v2150 = vld [vmem:[%s7] sm:$0xf]
  %v2151 = vld [vmem:[%s7 + $0x4] sm:$0xf]
  %v2152 = vld [vmem:[%s7 + $0x8] sm:$0xf]
  %v2153 = vld [vmem:[%s7 + $0xc] sm:$0xf]
  %v2154 = vld [vmem:[%s7 + $0x10] sm:$0xf]
  %v2155 = vld [vmem:[%s7 + $0x14] sm:$0xf]
  %v2156 = vld [vmem:[%s7 + $0x18] sm:$0xf]
  %v2157 = vld [vmem:[%s7 + $0x1c] sm:$0xf]
  %v2158 = vld [vmem:[%s7 + $0x20] sm:$0xf]
  %v2159 = vld [vmem:[%s7 + $0x24] sm:$0xf]
  %v2160 = vld [vmem:[%s7 + $0x28] sm:$0xf]
  %v2161 = vld [vmem:[%s7 + $0x2c] sm:$0xf]
  %v2162 = vld [vmem:[%s7 + $0x30] sm:$0xf]
  %v2163 = vld [vmem:[%s7 + $0x34] sm:$0xf]
  %v2164 = vld [vmem:[%s7 + $0x38] sm:$0xf]
  %v2165 = vld [vmem:[%s7 + $0x3c] sm:$0xf]
  %v2166 = vld [vmem:[%s8] sm:$0x1]
  %v2168 = vperm.slane %v2166, 0
  %v2186 = vunpack.c.l.b16 %v2150
  %v2187 = vunpack.c.l.b16 %v2151
  %v2188 = vunpack.c.l.b16 %v2152
  %v2189 = vunpack.c.l.b16 %v2153
  %v2190 = vunpack.c.l.b16 %v2154
  %v2191 = vunpack.c.l.b16 %v2155
  %v2192 = vunpack.c.l.b16 %v2156
  %v2193 = vunpack.c.l.b16 %v2157
  %v2194 = vunpack.c.l.b16 %v2158
  %v2195 = vunpack.c.l.b16 %v2159
  %v2196 = vunpack.c.l.b16 %v2160
  %v2197 = vunpack.c.l.b16 %v2161
  %v2198 = vunpack.c.l.b16 %v2162
  %v2199 = vunpack.c.l.b16 %v2163
  %v2200 = vunpack.c.l.b16 %v2164
  %v2201 = vunpack.c.l.b16 %v2165
  %v2202 = vpack.c.b16 %v2187, %v2186
  %v2203 = vpack.c.b16 %v2189, %v2188
  %v2204 = vpack.c.b16 %v2191, %v2190
  %v2205 = vpack.c.b16 %v2193, %v2192
  %v2206 = vpack.c.b16 %v2195, %v2194
  %v2207 = vpack.c.b16 %v2197, %v2196
  %v2208 = vpack.c.b16 %v2199, %v2198
  %v2209 = vpack.c.b16 %v2201, %v2200
  %2218 = vmatpush.bf16.msra.mxu0 %v2209
  %2219 = vmatpush.bf16.msra.mxu0 %v2208
  %2220 = vmatpush.bf16.msra.mxu0 %v2207
  %2221 = vmatpush.bf16.msra.mxu0 %v2206
  %2222 = vmatpush.bf16.msra.mxu0 %v2205
  %2223 = vmatpush.bf16.msra.mxu0 %v2204
  %2224 = vmatpush.bf16.msra.mxu0 %v2203
  %2225 = vmatpush.bf16.msra.mxu0 %v2202
  %2226 = vmatmul.bf16.gmra.mxu0 %v2149
  %v2227 = vpop.f32.mrf.mxu0
  %v2228 = vadd.f32 %v2168, %v2227
  %v2229 = vpop.f32.mrf.mxu0
  %2230 = vdwg.mxu0
  %2231 = vst [vmem:[%s9] sm:$0xff] %v2228
  // Predicated region
  $region42: #{wwm_forward.1} parent=0 // pred_check
    _
  $region43: #{wwm_forward.1} parent=0 // pred_check_branch
    %2233 = sbr.rel (0) target = $region45
  $region44: #{wwm_forward.1} parent=0 // pred_region
    _
  $region45: #{wwm_forward.1} parent=0 // pred_fallthru
    _
  // Predicated region
  $region46: #{wwm_forward.1} parent=0 // pred_check
    _
  $region47: #{wwm_forward.1} parent=0 // pred_check_branch
    %2235 = sbr.rel (0) target = $region49
  $region48: #{wwm_forward.1} parent=0 // pred_region
    _
  $region49: #{wwm_forward.1} parent=0 // pred_fallthru
    _

</llo_original>
